<compile_context>
chip_gen: v5e
topology: v5e:2x2
jax: 0.10.0
libtpu: 0.0.40
codegen_flags: <defaults>
</compile_context>

<pallas_src>
import functools

import jax
import jax.numpy as jnp
from jax.experimental import pallas as pl
from jax.experimental.pallas import tpu as pltpu


def _round_up(x, m):
    return ((x + m - 1) // m) * m


def att_bahdanau_kernel(q_ref, yt_ref, wqt_ref, bq_ref, wy_ref, byc_ref,
                        vcol_ref, bv_ref, att_ref, sim_ref,
                        yp_ref, mx_ref, *, ty_tile, ty_valid):
    # q_ref:   (1, tq_tile, q_dim)   query rows for batch b (this Tq tile)
    # yt_ref:  (1, y_dim, Ty_pad)    y for batch b, pre-transposed in wrapper
    # wqt_ref: (q_dim, A)   bq_ref:  (1, A)
    # wy_ref:  (A, y_dim)   byc_ref: (A, 1)
    # vcol_ref:(A, 1)       bv_ref:  (1, 1)
    # att_ref: (1, tq_tile, Ty_pad)
    # sim_ref: (1, tq_tile, 1)
    # yp_ref:  (A, Ty_pad) f32  -- cached TRANSPOSED y-projection per batch
    # mx_ref:  (tq_tile, ty_tile) f32 -- running max over Ty chunks
    tq_tile = q_ref.shape[1]
    att_dim = wqt_ref.shape[1]
    ty_pad = yp_ref.shape[1]
    num_ty = ty_pad // ty_tile

    # Recompute the (transposed) y projection only when a new batch element
    # starts (inner grid axis iterates Tq tiles for a fixed b; B is "parallel",
    # Tq is "arbitrary", so this guard is safe).
    @pl.when(pl.program_id(1) == 0)
    def _():
        yp_ref[...] = (
            jnp.dot(wy_ref[...], yt_ref[0], preferred_element_type=jnp.float32)
            + byc_ref[...])                                  # (A, Ty_pad)

    # Query projection for this tile.
    qp = (jnp.dot(q_ref[0], wqt_ref[...], preferred_element_type=jnp.float32)
          + bq_ref[...])                                     # (tq, A) f32

    # Hoist the expensive lane-splat broadcasts out of the Ty-chunk loop.
    qp_b = jnp.broadcast_to(qp[:, :, None], (tq_tile, att_dim, ty_tile))
    v_b = jnp.broadcast_to(vcol_ref[...][None, :, :], (1, att_dim, ty_tile))
    bv_b = jnp.broadcast_to(bv_ref[...], (tq_tile, ty_tile))
    lane = jax.lax.broadcasted_iota(jnp.int32, (1, ty_tile), 1)

    mx_ref[...] = jnp.full((tq_tile, ty_tile), -jnp.inf, dtype=jnp.float32)

    def chunk_body(off):
        ypc = yp_ref[:, pl.ds(off, ty_tile)]                 # (A, ty_tile)
        # Slab (tq, A, ty): tanh on the EUP; ypc broadcast along the major dim
        # is free, qp's lane splat was hoisted above.
        t = jnp.tanh(qp_b + ypc[None, :, :])
        # v-contraction along the SUBLANE axis (axis=1): VPU adds + small fold.
        scores = jnp.sum(t * v_b, axis=1) + bv_b             # (tq, ty_tile)
        att_ref[0, :, pl.ds(off, ty_tile)] = scores.astype(att_ref.dtype)
        if ty_pad != ty_valid:                               # static branch
            scores = jnp.where(off + lane < ty_valid, scores, -jnp.inf)
        mx_ref[...] = jnp.maximum(mx_ref[...], scores)

    if num_ty <= 8:
        # Static unroll: all slice offsets are compile-time constants.
        for j in range(num_ty):
            chunk_body(j * ty_tile)
    else:
        @pl.loop(0, num_ty)
        def _(j):
            chunk_body(pl.multiple_of(j * ty_tile, ty_tile))

    # One lane reduce per Tq tile; wrapper reshapes (B, Tq, 1) -> (B, 1, Tq).
    sim_ref[0] = jnp.max(mx_ref[...], axis=-1, keepdims=True).astype(sim_ref.dtype)


def att_bahdanau_forward(query, y, wq, bq, wy, by, vw, vb):
    """query: (B, Tq, q_dim); y: (B, Ty, y_dim).
    wq: (A, q_dim), bq: (A,); wy: (A, y_dim), by: (A,); vw: (1, A), vb: (1,).
    Returns (att: (B, Tq, Ty), sim: (B, 1, Tq))."""
    B, Tq, q_dim = query.shape
    By, Ty, y_dim = y.shape
    assert By == B
    att_dim = wq.shape[0]
    assert wq.shape == (att_dim, q_dim)
    assert wy.shape == (att_dim, y_dim)
    assert vw.shape == (1, att_dim)

    TY_TILE = 128
    TQ_TILE = 128 if Tq >= 128 else _round_up(Tq, 8)
    Tq_pad = _round_up(Tq, TQ_TILE)
    Ty_pad = _round_up(Ty, TY_TILE)

    q_p = query if Tq_pad == Tq else jnp.pad(
        query, ((0, 0), (0, Tq_pad - Tq), (0, 0)))
    yT = jnp.transpose(y, (0, 2, 1))                         # (B, y_dim, Ty)
    yT_p = yT if Ty_pad == Ty else jnp.pad(
        yT, ((0, 0), (0, 0), (0, Ty_pad - Ty)))

    wqt = wq.T                                               # (q_dim, A)
    bq_row = bq.reshape(1, att_dim)
    by_col = by.reshape(att_dim, 1)
    v_col = vw.reshape(att_dim, 1)
    bv2 = vb.reshape(1, 1)

    grid = (B, Tq_pad // TQ_TILE)

    kernel = functools.partial(att_bahdanau_kernel, ty_tile=TY_TILE, ty_valid=Ty)

    att_p, sim_col = pl.pallas_call(
        kernel,
        out_shape=(
            jax.ShapeDtypeStruct((B, Tq_pad, Ty_pad), query.dtype),
            jax.ShapeDtypeStruct((B, Tq_pad, 1), query.dtype),
        ),
        grid_spec=pltpu.PrefetchScalarGridSpec(
            num_scalar_prefetch=0,
            grid=grid,
            in_specs=[
                pl.BlockSpec((1, TQ_TILE, q_dim), lambda b, i: (b, i, 0)),
                pl.BlockSpec((1, y_dim, Ty_pad), lambda b, i: (b, 0, 0)),
                pl.BlockSpec((q_dim, att_dim), lambda b, i: (0, 0)),
                pl.BlockSpec((1, att_dim), lambda b, i: (0, 0)),
                pl.BlockSpec((att_dim, y_dim), lambda b, i: (0, 0)),
                pl.BlockSpec((att_dim, 1), lambda b, i: (0, 0)),
                pl.BlockSpec((att_dim, 1), lambda b, i: (0, 0)),
                pl.BlockSpec((1, 1), lambda b, i: (0, 0)),
            ],
            out_specs=[
                pl.BlockSpec((1, TQ_TILE, Ty_pad), lambda b, i: (b, i, 0)),
                pl.BlockSpec((1, TQ_TILE, 1), lambda b, i: (b, i, 0)),
            ],
            scratch_shapes=[
                pltpu.VMEM((att_dim, Ty_pad), jnp.float32),
                pltpu.VMEM((TQ_TILE, TY_TILE), jnp.float32),
            ],
        ),
        compiler_params=pltpu.CompilerParams(
            dimension_semantics=("parallel", "arbitrary"),
            vmem_limit_bytes=48 * 1024 * 1024),
    )(q_p, yT_p, wqt, bq_row, wy, by_col, v_col, bv2)

    att = att_p[:, :Tq, :Ty]
    # (B, Tq, 1) -> (B, 1, Tq): pure layout reinterpretation after the slice.
    sim = sim_col[:, :Tq, 0][:, None, :]
    return att, sim


def reference_forward(query, y, wq, bq, wy, by, vw, vb):
    qp = query @ wq.T + bq                                   # (B, Tq, A)
    yp = y @ wy.T + by                                       # (B, Ty, A)
    t = jnp.tanh(qp[:, None, :, :] + yp[:, :, None, :])      # (B, Ty, Tq, A)
    att = jnp.einsum('btqa,a->btq', t, vw[0]) + vb[0]        # (B, Ty, Tq)
    att = jnp.transpose(att, (0, 2, 1))                      # (B, Tq, Ty)
    sim = jnp.max(att, axis=2)[:, None, :]                   # (B, 1, Tq)
    return att, sim


if __name__ == "__main__":
    # Small shapes consistent with the module: batch=2, query seq=8,
    # key seq=16, q_dim=y_dim=32, att_dim=128 (module default).
    B, Tq, Ty = 2, 8, 16
    q_dim, y_dim, att_dim = 32, 32, 128

    key = jax.random.PRNGKey(0)
    kq, ky, k1, k2, k3, k4, k5, k6 = jax.random.split(key, 8)

    query = jax.random.normal(kq, (B, Tq, q_dim), dtype=jnp.float32)
    y = jax.random.normal(ky, (B, Ty, y_dim), dtype=jnp.float32)

    def linear_params(kw, kb, out_dim, in_dim):
        bound = 1.0 / (in_dim ** 0.5)
        w = jax.random.uniform(kw, (out_dim, in_dim), minval=-bound,
                               maxval=bound, dtype=jnp.float32)
        b = jax.random.uniform(kb, (out_dim,), minval=-bound,
                               maxval=bound, dtype=jnp.float32)
        return w, b

    wq, bq = linear_params(k1, k2, att_dim, q_dim)   # Wq: Linear(q_dim, A)
    wy, by = linear_params(k3, k4, att_dim, y_dim)   # Wy: Linear(y_dim, A)
    vw, vb = linear_params(k5, k6, 1, att_dim)       # v : Linear(A, 1)

    att, sim = att_bahdanau_forward(query, y, wq, bq, wy, by, vw, vb)
    att = jax.block_until_ready(att)
    sim = jax.block_until_ready(sim)

    att_ref, sim_ref = reference_forward(query, y, wq, bq, wy, by, vw, vb)
    assert att.shape == (B, Tq, Ty)
    assert sim.shape == (B, 1, Tq)
    assert jnp.allclose(att, att_ref, atol=1e-5, rtol=1e-5), "att mismatch"
    assert jnp.allclose(sim, sim_ref, atol=1e-5, rtol=1e-5), "sim mismatch"

    print("KERNEL_OK")
</pallas_src>

<mosaic_0001>
module attributes {stable_mosaic.version = 11 : i64} {
  func.func @att_bahdanau_kernel(%arg0: i32, %arg1: i32, %arg2: memref<1x8x32xf32, #tpu.memory_space<vmem>>, %arg3: memref<1x32x128xf32, #tpu.memory_space<vmem>>, %arg4: memref<32x128xf32, #tpu.memory_space<vmem>>, %arg5: memref<1x128xf32, #tpu.memory_space<vmem>>, %arg6: memref<128x32xf32, #tpu.memory_space<vmem>>, %arg7: memref<128x1xf32, #tpu.memory_space<vmem>>, %arg8: memref<128x1xf32, #tpu.memory_space<vmem>>, %arg9: memref<1x1xf32, #tpu.memory_space<vmem>>, %arg10: memref<1x8x128xf32, #tpu.memory_space<vmem>>, %arg11: memref<1x8x1xf32, #tpu.memory_space<vmem>>, %arg12: memref<128x128xf32, #tpu.memory_space<vmem>>, %arg13: memref<8x128xf32, #tpu.memory_space<vmem>>) attributes {dimension_semantics = [#tpu.dimension_semantics<parallel>, #tpu.dimension_semantics<arbitrary>], iteration_bounds = array<i64: 2, 1>, scalar_prefetch = 0 : i64, scratch_operands = 2 : i64, tpu.core_type = #tpu.core_type<tc>, window_params = [{transform_indices = @transform_0, window_bounds = array<i64: 1, 8, 32>}, {transform_indices = @transform_1, window_bounds = array<i64: 1, 32, 128>}, {pipeline_mode = #tpu.pipeline_mode<synchronous>, transform_indices = @transform_2, window_bounds = array<i64: 32, 128>}, {pipeline_mode = #tpu.pipeline_mode<synchronous>, transform_indices = @transform_3, window_bounds = array<i64: 1, 128>}, {pipeline_mode = #tpu.pipeline_mode<synchronous>, transform_indices = @transform_4, window_bounds = array<i64: 128, 32>}, {pipeline_mode = #tpu.pipeline_mode<synchronous>, transform_indices = @transform_5, window_bounds = array<i64: 128, 1>}, {pipeline_mode = #tpu.pipeline_mode<synchronous>, transform_indices = @transform_6, window_bounds = array<i64: 128, 1>}, {pipeline_mode = #tpu.pipeline_mode<synchronous>, transform_indices = @transform_7, window_bounds = array<i64: 1, 1>}, {transform_indices = @transform_8, window_bounds = array<i64: 1, 8, 128>}, {transform_indices = @transform_9, window_bounds = array<i64: 1, 8, 1>}]} {
    %c0_i32 = arith.constant 0 : i32
    %0 = arith.cmpi eq, %arg1, %c0_i32 : i32
    %1 = arith.extui %0 : i1 to i32
    %c0_i32_0 = arith.constant 0 : i32
    %2 = arith.cmpi ne, %1, %c0_i32_0 : i32
    scf.if %2 {
      %c0_32 = arith.constant 0 : index
      %c0_33 = arith.constant 0 : index
      %52 = vector.load %arg6[%c0_32, %c0_33] : memref<128x32xf32, #tpu.memory_space<vmem>>, vector<128x32xf32>
      %c0_34 = arith.constant 0 : index
      %c0_35 = arith.constant 0 : index
      %c0_36 = arith.constant 0 : index
      %53 = vector.load %arg3[%c0_34, %c0_35, %c0_36] : memref<1x32x128xf32, #tpu.memory_space<vmem>>, vector<1x32x128xf32>
      %54 = vector.shape_cast %53 : vector<1x32x128xf32> to vector<32x128xf32>
      %cst_37 = arith.constant dense<0.000000e+00> : vector<128x128xf32>
      %55 = tpu.matmul %52, %54, %cst_37 {dimension_numbers = #tpu.dot_dimension_numbers<[1], [0], [0], [1], [0, 0, 1, 1], [], []>} : vector<128x32xf32>, vector<32x128xf32>, vector<128x128xf32> -> vector<128x128xf32>
      %c0_38 = arith.constant 0 : index
      %c0_39 = arith.constant 0 : index
      %56 = vector.load %arg7[%c0_38, %c0_39] : memref<128x1xf32, #tpu.memory_space<vmem>>, vector<128x1xf32>
      %57 = vector.broadcast %56 : vector<128x1xf32> to vector<128x128xf32>
      %58 = arith.addf %55, %57 : vector<128x128xf32>
      %c0_40 = arith.constant 0 : index
      %c0_41 = arith.constant 0 : index
      %59 = vector.load %arg12[%c0_40, %c0_41] : memref<128x128xf32, #tpu.memory_space<vmem>>, vector<128x128xf32>
      tpu.vector_store %arg12[%c0_40, %c0_41], %58 {strides = array<i32>} : memref<128x128xf32, #tpu.memory_space<vmem>>, vector<128x128xf32>,
    } else {
    }
    %c0 = arith.constant 0 : index
    %c0_1 = arith.constant 0 : index
    %c0_2 = arith.constant 0 : index
    %3 = vector.load %arg2[%c0, %c0_1, %c0_2] : memref<1x8x32xf32, #tpu.memory_space<vmem>>, vector<1x8x32xf32>
    %4 = vector.shape_cast %3 : vector<1x8x32xf32> to vector<8x32xf32>
    %c0_3 = arith.constant 0 : index
    %c0_4 = arith.constant 0 : index
    %5 = vector.load %arg4[%c0_3, %c0_4] : memref<32x128xf32, #tpu.memory_space<vmem>>, vector<32x128xf32>
    %cst = arith.constant dense<0.000000e+00> : vector<8x128xf32>
    %6 = tpu.matmul %4, %5, %cst {dimension_numbers = #tpu.dot_dimension_numbers<[1], [0], [0], [1], [0, 0, 1, 1], [], []>} : vector<8x32xf32>, vector<32x128xf32>, vector<8x128xf32> -> vector<8x128xf32>
    %c0_5 = arith.constant 0 : index
    %c0_6 = arith.constant 0 : index
    %7 = vector.load %arg5[%c0_5, %c0_6] : memref<1x128xf32, #tpu.memory_space<vmem>>, vector<1x128xf32>
    %8 = vector.broadcast %7 : vector<1x128xf32> to vector<8x128xf32>
    %9 = arith.addf %6, %8 : vector<8x128xf32>
    %10 = vector.shape_cast %9 : vector<8x128xf32> to vector<8x128x1xf32>
    %11 = vector.shape_cast %10 : vector<8x128x1xf32> to vector<8x128x1xf32>
    %12 = vector.broadcast %11 : vector<8x128x1xf32> to vector<8x128x128xf32>
    %c0_7 = arith.constant 0 : index
    %c0_8 = arith.constant 0 : index
    %13 = vector.load %arg8[%c0_7, %c0_8] : memref<128x1xf32, #tpu.memory_space<vmem>>, vector<128x1xf32>
    %14 = vector.shape_cast %13 : vector<128x1xf32> to vector<1x128x1xf32>
    %15 = vector.shape_cast %14 : vector<1x128x1xf32> to vector<1x128x1xf32>
    %16 = vector.broadcast %15 : vector<1x128x1xf32> to vector<1x128x128xf32>
    %c0_9 = arith.constant 0 : index
    %c0_10 = arith.constant 0 : index
    %17 = vector.load %arg9[%c0_9, %c0_10] : memref<1x1xf32, #tpu.memory_space<vmem>>, vector<1x1xf32>
    %18 = vector.shape_cast %17 : vector<1x1xf32> to vector<1x1xf32>
    %19 = vector.broadcast %18 : vector<1x1xf32> to vector<8x128xf32>
    %20 = tpu.iota {dimensions = array<i32: 1>} : vector<1x128xi32>
    %cst_11 = arith.constant 0xFF800000 : f32
    %21 = vector.broadcast %cst_11 : f32 to vector<8x128xf32>
    %c0_12 = arith.constant 0 : index
    %c0_13 = arith.constant 0 : index
    %22 = vector.load %arg13[%c0_12, %c0_13] : memref<8x128xf32, #tpu.memory_space<vmem>>, vector<8x128xf32>
    tpu.vector_store %arg13[%c0_12, %c0_13], %21 {strides = array<i32>} : memref<8x128xf32, #tpu.memory_space<vmem>>, vector<8x128xf32>,
    %c0_14 = arith.constant 0 : index
    %c0_15 = arith.constant 0 : index
    %23 = vector.load %arg12[%c0_14, %c0_15] : memref<128x128xf32, #tpu.memory_space<vmem>>, vector<128x128xf32>
    %24 = vector.shape_cast %23 : vector<128x128xf32> to vector<1x128x128xf32>
    %25 = vector.broadcast %24 : vector<1x128x128xf32> to vector<8x128x128xf32>
    %26 = arith.addf %12, %25 : vector<8x128x128xf32>
    %27 = math.tanh %26 : vector<8x128x128xf32>
    %28 = vector.broadcast %16 : vector<1x128x128xf32> to vector<8x128x128xf32>
    %29 = arith.mulf %27, %28 : vector<8x128x128xf32>
    %cst_16 = arith.constant dense<0.000000e+00> : vector<8x128xf32>
    %30 = vector.multi_reduction <add>, %29, %cst_16 [1] : vector<8x128x128xf32> to vector<8x128xf32>
    %31 = arith.addf %30, %19 : vector<8x128xf32>
    %c0_17 = arith.constant 0 : index
    %c0_18 = arith.constant 0 : index
    %c0_19 = arith.constant 0 : index
    %32 = vector.load %arg10[%c0_17, %c0_18, %c0_19] : memref<1x8x128xf32, #tpu.memory_space<vmem>>, vector<1x8x128xf32>
    %33 = vector.shape_cast %32 : vector<1x8x128xf32> to vector<8x128xf32>
    %34 = vector.shape_cast %31 : vector<8x128xf32> to vector<1x8x128xf32>
    tpu.vector_store %arg10[%c0_17, %c0_18, %c0_19], %34 {strides = array<i32>} : memref<1x8x128xf32, #tpu.memory_space<vmem>>, vector<1x8x128xf32>,
    %c0_i32_20 = arith.constant 0 : i32
    %35 = vector.broadcast %c0_i32_20 : i32 to vector<1x128xi32>
    %36 = arith.addi %35, %20 : vector<1x128xi32>
    %c16_i32 = arith.constant 16 : i32
    %37 = vector.broadcast %c16_i32 : i32 to vector<1x128xi32>
    %38 = arith.cmpi slt, %36, %37 : vector<1x128xi32>
    %cst_21 = arith.constant 0xFF800000 : f32
    %39 = vector.shape_cast %38 : vector<1x128xi1> to vector<1x128xi1>
    %40 = vector.broadcast %39 : vector<1x128xi1> to vector<8x128xi1>
    %41 = vector.broadcast %cst_21 : f32 to vector<8x128xf32>
    %42 = arith.select %40, %31, %41 : vector<8x128xi1>, vector<8x128xf32>
    %c0_22 = arith.constant 0 : index
    %c0_23 = arith.constant 0 : index
    %43 = vector.load %arg13[%c0_22, %c0_23] : memref<8x128xf32, #tpu.memory_space<vmem>>, vector<8x128xf32>
    %44 = arith.maximumf %43, %42 : vector<8x128xf32>
    %c0_24 = arith.constant 0 : index
    %c0_25 = arith.constant 0 : index
    %45 = vector.load %arg13[%c0_24, %c0_25] : memref<8x128xf32, #tpu.memory_space<vmem>>, vector<8x128xf32>
    tpu.vector_store %arg13[%c0_24, %c0_25], %44 {strides = array<i32>} : memref<8x128xf32, #tpu.memory_space<vmem>>, vector<8x128xf32>,
    %c0_26 = arith.constant 0 : index
    %c0_27 = arith.constant 0 : index
    %46 = vector.load %arg13[%c0_26, %c0_27] : memref<8x128xf32, #tpu.memory_space<vmem>>, vector<8x128xf32>
    %cst_28 = arith.constant dense<0xFF800000> : vector<8xf32>
    %47 = vector.multi_reduction <maximumf>, %46, %cst_28 [1] : vector<8x128xf32> to vector<8xf32>
    %48 = vector.shape_cast %47 : vector<8xf32> to vector<8x1xf32>
    %c0_29 = arith.constant 0 : index
    %c0_30 = arith.constant 0 : index
    %c0_31 = arith.constant 0 : index
    %49 = vector.load %arg11[%c0_29, %c0_30, %c0_31] : memref<1x8x1xf32, #tpu.memory_space<vmem>>, vector<1x8x1xf32>
    %50 = vector.shape_cast %49 : vector<1x8x1xf32> to vector<8x1xf32>
    %51 = vector.shape_cast %48 : vector<8x1xf32> to vector<1x8x1xf32>
    tpu.vector_store %arg11[%c0_29, %c0_30, %c0_31], %51 {strides = array<i32>} : memref<1x8x1xf32, #tpu.memory_space<vmem>>, vector<1x8x1xf32>,
    return
  }
  func.func @transform_0(%arg0: i32, %arg1: i32) -> (i32, i32, i32) {
    %c0_i32 = arith.constant 0 : i32
    %c0_i32_0 = arith.constant 0 : i32
    return %arg0, %arg1, %c0_i32 : i32, i32, i32
  }
  func.func @transform_1(%arg0: i32, %arg1: i32) -> (i32, i32, i32) {
    %c0_i32 = arith.constant 0 : i32
    %c0_i32_0 = arith.constant 0 : i32
    %c0_i32_1 = arith.constant 0 : i32
    return %arg0, %c0_i32, %c0_i32_0 : i32, i32, i32
  }
  func.func @transform_2(%arg0: i32, %arg1: i32) -> (i32, i32) {
    %c0_i32 = arith.constant 0 : i32
    %c0_i32_0 = arith.constant 0 : i32
    %c0_i32_1 = arith.constant 0 : i32
    return %c0_i32, %c0_i32_0 : i32, i32
  }
  func.func @transform_3(%arg0: i32, %arg1: i32) -> (i32, i32) {
    %c0_i32 = arith.constant 0 : i32
    %c0_i32_0 = arith.constant 0 : i32
    %c0_i32_1 = arith.constant 0 : i32
    return %c0_i32, %c0_i32_0 : i32, i32
  }
  func.func @transform_4(%arg0: i32, %arg1: i32) -> (i32, i32) {
    %c0_i32 = arith.constant 0 : i32
    %c0_i32_0 = arith.constant 0 : i32
    %c0_i32_1 = arith.constant 0 : i32
    return %c0_i32, %c0_i32_0 : i32, i32
  }
  func.func @transform_5(%arg0: i32, %arg1: i32) -> (i32, i32) {
    %c0_i32 = arith.constant 0 : i32
    %c0_i32_0 = arith.constant 0 : i32
    %c0_i32_1 = arith.constant 0 : i32
    return %c0_i32, %c0_i32_0 : i32, i32
  }
  func.func @transform_6(%arg0: i32, %arg1: i32) -> (i32, i32) {
    %c0_i32 = arith.constant 0 : i32
    %c0_i32_0 = arith.constant 0 : i32
    %c0_i32_1 = arith.constant 0 : i32
    return %c0_i32, %c0_i32_0 : i32, i32
  }
  func.func @transform_7(%arg0: i32, %arg1: i32) -> (i32, i32) {
    %c0_i32 = arith.constant 0 : i32
    %c0_i32_0 = arith.constant 0 : i32
    %c0_i32_1 = arith.constant 0 : i32
    return %c0_i32, %c0_i32_0 : i32, i32
  }
  func.func @transform_8(%arg0: i32, %arg1: i32) -> (i32, i32, i32) {
    %c0_i32 = arith.constant 0 : i32
    %c0_i32_0 = arith.constant 0 : i32
    return %arg0, %arg1, %c0_i32 : i32, i32, i32
  }
  func.func @transform_9(%arg0: i32, %arg1: i32) -> (i32, i32, i32) {
    %c0_i32 = arith.constant 0 : i32
    %c0_i32_0 = arith.constant 0 : i32
    return %arg0, %arg1, %c0_i32 : i32, i32, i32
  }
}

</mosaic_0001>

<llo_original>
// kernel: tpu_custom_call.1
$region0: #{tpu_custom_call.1}
  #allocation0 [shape = 'u32[]', space=smem, size = 0x4, offset = 0x4, fixed_abs, tag = 'smem constant byte address 0x4 - core index']
  #allocation1 [shape = 'u32[72,128]{1,0:T(1,128)}', space=vmem, size = 0x9000, scoped, tag = 'internal scratch']
  #allocation2 [shape = 'f32[128,128]{1,0:T(8,128)}', space=vmem, size = 0x10000, scoped, tag = 'scratch operand']
  #allocation3 [shape = 'f32[8,128]{1,0:T(8,128)}', space=vmem, size = 0x1000, scoped, tag = 'scratch operand']
  #allocation4 [shape = 'f32[1,1]{1,0:T(1,128)S(1)}', space=vmem, size = 0x200, scoped, tag = 'scoped memory for tpu_custom_call.1']
  %s0 = inlined_call_operand.vmem [shape: f32[2,8,32], index: 0, kind: input, shape index: {}]
  %s1 = inlined_call_operand.vmem [shape: f32[2,32,128], index: 1, kind: input, shape index: {}]
  %s2 = inlined_call_operand.vmem [shape: f32[32,128], index: 2, kind: input, shape index: {}]
  %s3 = inlined_call_operand.vmem [shape: f32[1,128], index: 3, kind: input, shape index: {}]
  %s4 = inlined_call_operand.vmem [shape: f32[128,32], index: 4, kind: input, shape index: {}]
  %s5 = inlined_call_operand.vmem [shape: f32[128,1], index: 5, kind: input, shape index: {}]
  %s6 = inlined_call_operand.vmem [shape: f32[128,1], index: 6, kind: input, shape index: {}]
  %s7 = inlined_call_operand.<no memory space> [shape: f32[1,1], index: 7, kind: input, shape index: {}]
  %s8 = inlined_call_operand.hbm [shape: f32[2,8,128], index: 8, kind: output, shape index: {0}]
  %s9 = inlined_call_operand.vmem [shape: f32[2,8,1], index: 9, kind: output, shape index: {1}]
  %10 = xla_tuple %s8, %s9
  %s11 = sld [smem:[#allocation0]]
  $region77: #{tpu_custom_call.1} parent=0
    _
  %s13 = ssub.s32 1, %s11
  %s14 = scalar_select 0, %s13, %s11
  %v15 = vstv %s7
  %16 = vst [vmem:[#allocation4] sm:$0x1] %v15
  $region1: #{tpu_custom_call.1} parent=0
    #allocation5 [shape = 'u8[8192]{0}', space=vmem, size = 0x2000, scoped, tag = 'output window, operand 0']
    #allocation6 [shape = 's32[2]{0}', space=sflag, size = 0x8, scoped, tag = 'scoped memory for tpu_custom_call.1']
    %17 = vsyncpa [#allocation6], 0
    %s18 = scalar_lea.sflag [#allocation6], 1
    %19 = vsyncpa %s18, 0
    loop: start=0, step=1, limit=4
    $region2: #{tpu_custom_call.1} parent=1 // loop_pre_header
      _
    $region3: #{tpu_custom_call.1} parent=1 // loop_header
      %s21 = sphi 0, %s25
      %p22 = scmp.ge.s32.totalorder %s21, 4
      %s28 = sphi 0, %s40
      %s29 = sphi 0, %s36
      %s30 = sphi 0, %s28
      %s31 = sphi 0, %s29
      %s32 = sphi 0, %s30
      %s33 = sphi 0, %s31
      %s45 = sphi 0, %s47
      %s48 = sphi 0, %s45
      %s49 = sphi 0, %s48
      %s65 = sphi 0, %s49
      %s71 = sphi 0, %s73
      %s74 = sphi 0, %s71
      %s75 = sphi 0, %s74
      %s91 = sphi 0, %s75
      %s95 = sphi 0, %s95
      %s97 = sphi 0, %s95
      %s98 = sphi 0, %s97
      %s112 = sphi 0, %s98
      %s116 = sphi 0, %s116
      %s118 = sphi 0, %s116
      %s119 = sphi 0, %s118
      %s133 = sphi 0, %s119
      %s137 = sphi 0, %s137
      %s139 = sphi 0, %s137
      %s140 = sphi 0, %s139
      %s154 = sphi 0, %s140
      %s158 = sphi 0, %s158
      %s160 = sphi 0, %s158
      %s161 = sphi 0, %s160
      %s175 = sphi 0, %s161
      %s179 = sphi 0, %s179
      %s181 = sphi 0, %s179
      %s182 = sphi 0, %s181
      %s196 = sphi 0, %s182
      %s200 = sphi 0, %s200
      %s202 = sphi 0, %s200
      %s203 = sphi 0, %s202
      %s217 = sphi 0, %s203
      %s225 = sphi 0, %s227
      %s228 = sphi 0, %s225
      %s229 = sphi 0, %s228
      %s245 = sphi 0, %s229
      %s253 = sphi 0, %s255
      %s256 = sphi 0, %s253
      %s257 = sphi 0, %s256
      %s273 = sphi 0, %s257
    $region4: #{tpu_custom_call.1} parent=1 // loop_header_branch
      %24 = sbr.rel (%p22) target = $region8
    $region5: #{tpu_custom_call.1} parent=1 // loop_body
      %s26 = ssub.s32 %s21, 1
      %s27 = ssub.s32 %s21, 2
      %s34 = sadd.s32 1, %s29
      %p35 = scmp.ge.s32.totalorder %s34, 1
      %s36 = scalar_select %p35, 0, %s34
      %s37 = sadd.s32 1, %s28
      %s38 = scalar_select %p35, %s37, %s28
      %p39 = scmp.ge.s32.totalorder %s38, 2
      %s40 = scalar_select %p39, 0, %s38
      %s41 = ssub.s32 %s28, %s40
      %s42 = ssub.s32 %s29, %s36
      %s43 = sor.u32 %s41, %s42
      %p44 = scmp.eq.s32.totalorder %s43, 0
      %s46 = sadd.s32 %s45, 1
      %s47 = scalar_select %p44, %s45, %s46
      %p50 = pneg %p44
      %p51 = scmp.eq.s32.totalorder %s21, 1
      %p52 = por %p50, %p51
      %p53 = scmp.ne.s32.totalorder %s45, %s48
      %p54 = scmp.eq.s32.totalorder %s21, 0
      %p55 = por %p53, %p54
      %p56 = scmp.ne.s32.totalorder %s45, %s48
      %p57 = scmp.eq.s32.totalorder %s26, 1
      %p58 = por %p56, %p57
      %p59 = scmp.ne.s32.totalorder %s48, %s49
      %p60 = scmp.eq.s32.totalorder %s26, 0
      %p61 = por %p59, %p60
      %p62 = scmp.ne.s32.totalorder %s48, %s49
      %p63 = scmp.eq.s32.totalorder %s27, 1
      %p64 = por %p62, %p63
      %p66 = scmp.ne.s32.totalorder %s49, %s65
      %p67 = scmp.eq.s32.totalorder %s27, 0
      %p68 = por %p66, %p67
      %s69 = ssub.s32 %s28, %s40
      %p70 = scmp.eq.s32.totalorder %s69, 0
      %s72 = sadd.s32 %s71, 1
      %s73 = scalar_select %p70, %s71, %s72
      %p76 = pneg %p70
      %p77 = scmp.eq.s32.totalorder %s21, 1
      %p78 = por %p76, %p77
      %p79 = scmp.ne.s32.totalorder %s71, %s74
      %p80 = scmp.eq.s32.totalorder %s21, 0
      %p81 = por %p79, %p80
      %p82 = scmp.ne.s32.totalorder %s71, %s74
      %p83 = scmp.eq.s32.totalorder %s26, 1
      %p84 = por %p82, %p83
      %p85 = scmp.ne.s32.totalorder %s74, %s75
      %p86 = scmp.eq.s32.totalorder %s26, 0
      %p87 = por %p85, %p86
      %p88 = scmp.ne.s32.totalorder %s74, %s75
      %p89 = scmp.eq.s32.totalorder %s27, 1
      %p90 = por %p88, %p89
      %p92 = scmp.ne.s32.totalorder %s75, %s91
      %p93 = scmp.eq.s32.totalorder %s27, 0
      %p94 = por %p92, %p93
      %s96 = sadd.s32 %s95, 1
      %p99 = scmp.eq.s32.totalorder %s21, 1
      %p100 = scmp.ne.s32.totalorder %s95, %s97
      %p101 = scmp.eq.s32.totalorder %s21, 0
      %p102 = por %p100, %p101
      %p103 = scmp.ne.s32.totalorder %s95, %s97
      %p104 = scmp.eq.s32.totalorder %s26, 1
      %p105 = por %p103, %p104
      %p106 = scmp.ne.s32.totalorder %s97, %s98
      %p107 = scmp.eq.s32.totalorder %s26, 0
      %p108 = por %p106, %p107
      %p109 = scmp.ne.s32.totalorder %s97, %s98
      %p110 = scmp.eq.s32.totalorder %s27, 1
      %p111 = por %p109, %p110
      %p113 = scmp.ne.s32.totalorder %s98, %s112
      %p114 = scmp.eq.s32.totalorder %s27, 0
      %p115 = por %p113, %p114
      %s117 = sadd.s32 %s116, 1
      %p120 = scmp.eq.s32.totalorder %s21, 1
      %p121 = scmp.ne.s32.totalorder %s116, %s118
      %p122 = scmp.eq.s32.totalorder %s21, 0
      %p123 = por %p121, %p122
      %p124 = scmp.ne.s32.totalorder %s116, %s118
      %p125 = scmp.eq.s32.totalorder %s26, 1
      %p126 = por %p124, %p125
      %p127 = scmp.ne.s32.totalorder %s118, %s119
      %p128 = scmp.eq.s32.totalorder %s26, 0
      %p129 = por %p127, %p128
      %p130 = scmp.ne.s32.totalorder %s118, %s119
      %p131 = scmp.eq.s32.totalorder %s27, 1
      %p132 = por %p130, %p131
      %p134 = scmp.ne.s32.totalorder %s119, %s133
      %p135 = scmp.eq.s32.totalorder %s27, 0
      %p136 = por %p134, %p135
      %s138 = sadd.s32 %s137, 1
      %p141 = scmp.eq.s32.totalorder %s21, 1
      %p142 = scmp.ne.s32.totalorder %s137, %s139
      %p143 = scmp.eq.s32.totalorder %s21, 0
      %p144 = por %p142, %p143
      %p145 = scmp.ne.s32.totalorder %s137, %s139
      %p146 = scmp.eq.s32.totalorder %s26, 1
      %p147 = por %p145, %p146
      %p148 = scmp.ne.s32.totalorder %s139, %s140
      %p149 = scmp.eq.s32.totalorder %s26, 0
      %p150 = por %p148, %p149
      %p151 = scmp.ne.s32.totalorder %s139, %s140
      %p152 = scmp.eq.s32.totalorder %s27, 1
      %p153 = por %p151, %p152
      %p155 = scmp.ne.s32.totalorder %s140, %s154
      %p156 = scmp.eq.s32.totalorder %s27, 0
      %p157 = por %p155, %p156
      %s159 = sadd.s32 %s158, 1
      %p162 = scmp.eq.s32.totalorder %s21, 1
      %p163 = scmp.ne.s32.totalorder %s158, %s160
      %p164 = scmp.eq.s32.totalorder %s21, 0
      %p165 = por %p163, %p164
      %p166 = scmp.ne.s32.totalorder %s158, %s160
      %p167 = scmp.eq.s32.totalorder %s26, 1
      %p168 = por %p166, %p167
      %p169 = scmp.ne.s32.totalorder %s160, %s161
      %p170 = scmp.eq.s32.totalorder %s26, 0
      %p171 = por %p169, %p170
      %p172 = scmp.ne.s32.totalorder %s160, %s161
      %p173 = scmp.eq.s32.totalorder %s27, 1
      %p174 = por %p172, %p173
      %p176 = scmp.ne.s32.totalorder %s161, %s175
      %p177 = scmp.eq.s32.totalorder %s27, 0
      %p178 = por %p176, %p177
      %s180 = sadd.s32 %s179, 1
      %p183 = scmp.eq.s32.totalorder %s21, 1
      %p184 = scmp.ne.s32.totalorder %s179, %s181
      %p185 = scmp.eq.s32.totalorder %s21, 0
      %p186 = por %p184, %p185
      %p187 = scmp.ne.s32.totalorder %s179, %s181
      %p188 = scmp.eq.s32.totalorder %s26, 1
      %p189 = por %p187, %p188
      %p190 = scmp.ne.s32.totalorder %s181, %s182
      %p191 = scmp.eq.s32.totalorder %s26, 0
      %p192 = por %p190, %p191
      %p193 = scmp.ne.s32.totalorder %s181, %s182
      %p194 = scmp.eq.s32.totalorder %s27, 1
      %p195 = por %p193, %p194
      %p197 = scmp.ne.s32.totalorder %s182, %s196
      %p198 = scmp.eq.s32.totalorder %s27, 0
      %p199 = por %p197, %p198
      %s201 = sadd.s32 %s200, 1
      %p204 = scmp.eq.s32.totalorder %s21, 1
      %p205 = scmp.ne.s32.totalorder %s200, %s202
      %p206 = scmp.eq.s32.totalorder %s21, 0
      %p207 = por %p205, %p206
      %p208 = scmp.ne.s32.totalorder %s200, %s202
      %p209 = scmp.eq.s32.totalorder %s26, 1
      %p210 = por %p208, %p209
      %p211 = scmp.ne.s32.totalorder %s202, %s203
      %p212 = scmp.eq.s32.totalorder %s26, 0
      %p213 = por %p211, %p212
      %p214 = scmp.ne.s32.totalorder %s202, %s203
      %p215 = scmp.eq.s32.totalorder %s27, 1
      %p216 = por %p214, %p215
      %p218 = scmp.ne.s32.totalorder %s203, %s217
      %p219 = scmp.eq.s32.totalorder %s27, 0
      %p220 = por %p218, %p219
      %s221 = ssub.s32 %s28, %s40
      %s222 = ssub.s32 %s29, %s36
      %s223 = sor.u32 %s221, %s222
      %p224 = scmp.eq.s32.totalorder %s223, 0
      %s226 = sadd.s32 %s225, 1
      %s227 = scalar_select %p224, %s225, %s226
      %p230 = pneg %p224
      %p231 = scmp.eq.s32.totalorder %s21, 1
      %p232 = por %p230, %p231
      %p233 = scmp.ne.s32.totalorder %s225, %s228
      %p234 = scmp.eq.s32.totalorder %s21, 0
      %p235 = por %p233, %p234
      %p236 = scmp.ne.s32.totalorder %s225, %s228
      %p237 = scmp.eq.s32.totalorder %s26, 1
      %p238 = por %p236, %p237
      %p239 = scmp.ne.s32.totalorder %s228, %s229
      %p240 = scmp.eq.s32.totalorder %s26, 0
      %p241 = por %p239, %p240
      %p242 = scmp.ne.s32.totalorder %s228, %s229
      %p243 = scmp.eq.s32.totalorder %s27, 1
      %p244 = por %p242, %p243
      %p246 = scmp.ne.s32.totalorder %s229, %s245
      %p247 = scmp.eq.s32.totalorder %s27, 0
      %p248 = por %p246, %p247
      %s249 = ssub.s32 %s28, %s40
      %s250 = ssub.s32 %s29, %s36
      %s251 = sor.u32 %s249, %s250
      %p252 = scmp.eq.s32.totalorder %s251, 0
      %s254 = sadd.s32 %s253, 1
      %s255 = scalar_select %p252, %s253, %s254
      %p258 = pneg %p252
      %p259 = scmp.eq.s32.totalorder %s21, 1
      %p260 = por %p258, %p259
      %p261 = scmp.ne.s32.totalorder %s253, %s256
      %p262 = scmp.eq.s32.totalorder %s21, 0
      %p263 = por %p261, %p262
      %p264 = scmp.ne.s32.totalorder %s253, %s256
      %p265 = scmp.eq.s32.totalorder %s26, 1
      %p266 = por %p264, %p265
      %p267 = scmp.ne.s32.totalorder %s256, %s257
      %p268 = scmp.eq.s32.totalorder %s26, 0
      %p269 = por %p267, %p268
      %p270 = scmp.ne.s32.totalorder %s256, %s257
      %p271 = scmp.eq.s32.totalorder %s27, 1
      %p272 = por %p270, %p271
      %p274 = scmp.ne.s32.totalorder %s257, %s273
      %p275 = scmp.eq.s32.totalorder %s27, 0
      %p276 = por %p274, %p275
      %p277 = scmp.le.s32.totalorder 1, %s21
      %p278 = scmp.lt.s32.totalorder %s21, 3
      %p279 = pnand %p277, %p278
      %p280 = pneg %p279
      // Predicated region
      $region9: #{tpu_custom_call.1} parent=5 // pred_check
        _
      $region10: #{tpu_custom_call.1} parent=5 // pred_check_branch
        %282 = sbr.rel (%p279) target = $region12
      $region11: #{tpu_custom_call.1} parent=5 // pred_region
        %s283 = ssub.s32 %s21, 1
        // Predicated region
        $region13: #{tpu_custom_call.1} parent=11 // pred_check
          %p284 = pneg %p108
        $region14: #{tpu_custom_call.1} parent=11 // pred_check_branch
          %286 = sbr.rel (%p284) target = $region16
        $region15: #{tpu_custom_call.1} parent=11 // pred_region
          _
        $region16: #{tpu_custom_call.1} parent=11 // pred_fallthru
          _
        // Predicated region
        $region17: #{tpu_custom_call.1} parent=11 // pred_check
          %p287 = pneg %p129
        $region18: #{tpu_custom_call.1} parent=11 // pred_check_branch
          %289 = sbr.rel (%p287) target = $region20
        $region19: #{tpu_custom_call.1} parent=11 // pred_region
          _
        $region20: #{tpu_custom_call.1} parent=11 // pred_fallthru
          _
        // Predicated region
        $region21: #{tpu_custom_call.1} parent=11 // pred_check
          %p290 = pneg %p150
        $region22: #{tpu_custom_call.1} parent=11 // pred_check_branch
          %292 = sbr.rel (%p290) target = $region24
        $region23: #{tpu_custom_call.1} parent=11 // pred_region
          _
        $region24: #{tpu_custom_call.1} parent=11 // pred_fallthru
          _
        // Predicated region
        $region25: #{tpu_custom_call.1} parent=11 // pred_check
          %p293 = pneg %p171
        $region26: #{tpu_custom_call.1} parent=11 // pred_check_branch
          %295 = sbr.rel (%p293) target = $region28
        $region27: #{tpu_custom_call.1} parent=11 // pred_region
          _
        $region28: #{tpu_custom_call.1} parent=11 // pred_fallthru
          _
        // Predicated region
        $region29: #{tpu_custom_call.1} parent=11 // pred_check
          %p296 = pneg %p192
        $region30: #{tpu_custom_call.1} parent=11 // pred_check_branch
          %298 = sbr.rel (%p296) target = $region32
        $region31: #{tpu_custom_call.1} parent=11 // pred_region
          _
        $region32: #{tpu_custom_call.1} parent=11 // pred_fallthru
          _
        // Predicated region
        $region33: #{tpu_custom_call.1} parent=11 // pred_check
          %p299 = pneg %p213
        $region34: #{tpu_custom_call.1} parent=11 // pred_check_branch
          %301 = sbr.rel (%p299) target = $region36
        $region35: #{tpu_custom_call.1} parent=11 // pred_region
          _
        $region36: #{tpu_custom_call.1} parent=11 // pred_fallthru
          _
      $region12: #{tpu_custom_call.1} parent=5 // pred_fallthru
        _
      %p302 = scmp.lt.s32.totalorder %s21, 2
      // Predicated region
      $region37: #{tpu_custom_call.1} parent=5 // pred_check
        %p303 = pneg %p302
      $region38: #{tpu_custom_call.1} parent=5 // pred_check_branch
        %305 = sbr.rel (%p303) target = $region40
      $region39: #{tpu_custom_call.1} parent=5 // pred_region
        // Predicated region
        $region41: #{tpu_custom_call.1} parent=39 // pred_check
          %p306 = pneg %p55
        $region42: #{tpu_custom_call.1} parent=39 // pred_check_branch
          %308 = sbr.rel (%p306) target = $region44
        $region43: #{tpu_custom_call.1} parent=39 // pred_region
          %p309 = scmp.lt.s32.totalorder %s28, 1
          %s310 = scalar_select %p309, %s28, 1
          %p311 = scmp.lt.s32.totalorder %s29, 0
          %s312 = scalar_select %p311, %s29, 0
          %s313 = sadd.s32 %s312, %s310
          %s314 = smul.addr %s313, 8
          %s315 = scalar_lea.vmem %s0, %s314
        $region44: #{tpu_custom_call.1} parent=39 // pred_fallthru
          _
        // Predicated region
        $region45: #{tpu_custom_call.1} parent=39 // pred_check
          %p316 = pneg %p81
        $region46: #{tpu_custom_call.1} parent=39 // pred_check_branch
          %318 = sbr.rel (%p316) target = $region48
        $region47: #{tpu_custom_call.1} parent=39 // pred_region
          %p319 = scmp.lt.s32.totalorder %s28, 1
          %s320 = scalar_select %p319, %s28, 1
          %s321 = smul.addr %s320, 4
          %s322 = smul.addr %s321, 8
          %s323 = scalar_lea.vmem %s1, %s322
        $region48: #{tpu_custom_call.1} parent=39 // pred_fallthru
          _
      $region40: #{tpu_custom_call.1} parent=5 // pred_fallthru
        _
      %p324 = scmp.le.s32.totalorder 1, %s21
      %p325 = scmp.lt.s32.totalorder %s21, 3
      %p326 = pnand %p324, %p325
      %p327 = pneg %p326
      // Predicated region
      $region49: #{tpu_custom_call.1} parent=5 // pred_check
        _
      $region50: #{tpu_custom_call.1} parent=5 // pred_check_branch
        %329 = sbr.rel (%p326) target = $region52
      $region51: #{tpu_custom_call.1} parent=5 // pred_region
        %s330 = ssub.s32 %s21, 1
        %p331 = scmp.lt.s32.totalorder %s30, 1
        %s332 = scalar_select %p331, %s30, 1
        %p333 = scmp.lt.s32.totalorder %s31, 0
        %s334 = scalar_select %p333, %s31, 0
        %s335 = sadd.s32 %s334, %s332
        %s336 = smul.addr %s335, 8
        %s337 = scalar_lea.vmem %s0, %s336
        %p338 = pneg %p61
        %p339 = pneg %p58
        %p340 = scmp.lt.s32.totalorder %s30, 1
        %s341 = scalar_select %p340, %s30, 1
        %s342 = smul.addr %s341, 4
        %s343 = smul.addr %s342, 8
        %s344 = scalar_lea.vmem %s1, %s343
        %p345 = pneg %p87
        %p346 = pneg %p84
        %p347 = pneg %p108
        %p348 = pneg %p105
        %p349 = pneg %p129
        %p350 = pneg %p126
        %p351 = pneg %p150
        %p352 = pneg %p147
        %p353 = pneg %p171
        %p354 = pneg %p168
        %p355 = pneg %p192
        %p356 = pneg %p189
        %p357 = pneg %p213
        %p358 = pneg %p210
        %p359 = pneg %p241
        %p360 = pneg %p238
        %s361 = sand.u32 %s228, 1
        %s362 = scalar_lea.sflag [#allocation6], %s361
        %s363 = sand.u32 %s228, 1
        %s364 = smul.addr %s363, 8
        %s365 = scalar_lea.vmem [#allocation5], %s364
        %p366 = pneg %p269
        %p367 = pneg %p266
        %p368 = scmp.lt.s32.totalorder %s30, 1
        %s369 = scalar_select %p368, %s30, 1
        %p370 = scmp.lt.s32.totalorder %s31, 0
        %s371 = scalar_select %p370, %s31, 0
        %s372 = sadd.s32 %s371, %s369
        %s373 = smul.addr %s372, 8
        %s374 = scalar_lea.vmem %s9, %s373
        %p375 = scmp.lt.s32.totalorder %s30, 1
        %s376 = scalar_select %p375, %s30, 1
        %p377 = scmp.lt.s32.totalorder %s31, 0
        %s378 = scalar_select %p377, %s31, 0
        %s379 = sadd.s32 %s378, %s376
        %s380 = smul.addr %s379, 8
        %s381 = scalar_lea.vmem %s0, %s380
        %p382 = scmp.lt.s32.totalorder %s30, 1
        %s383 = scalar_select %p382, %s30, 1
        %s384 = smul.addr %s383, 4
        %s385 = smul.addr %s384, 8
        %s386 = scalar_lea.vmem %s1, %s385
        %p387 = scmp.lt.s32.totalorder %s30, 1
        %s388 = scalar_select %p387, %s30, 1
        %p389 = scmp.lt.s32.totalorder %s31, 0
        %s390 = scalar_select %p389, %s31, 0
        %s391 = sadd.s32 %s390, %s388
        %s392 = smul.addr %s391, 8
        %s393 = scalar_lea.vmem %s9, %s392
        %p394 = scmp.eq.s32.totalorder %s31, 0
        // Predicated region
        $region53: #{tpu_custom_call.1} parent=51 // pred_check
          %p395 = pneg %p394
        $region54: #{tpu_custom_call.1} parent=51 // pred_check_branch
          %397 = sbr.rel (%p395) target = $region56
        $region55: #{tpu_custom_call.1} parent=51 // pred_region
          %v398 = vld [vmem:[%s4] sm:$0xff]
          %v399 = vld [vmem:[%s4 + $0x8] sm:$0xff]
          %v400 = vld [vmem:[%s4 + $0x10] sm:$0xff]
          %v401 = vld [vmem:[%s4 + $0x18] sm:$0xff]
          %v402 = vld [vmem:[%s4 + $0x20] sm:$0xff]
          %v403 = vld [vmem:[%s4 + $0x28] sm:$0xff]
          %v404 = vld [vmem:[%s4 + $0x30] sm:$0xff]
          %v405 = vld [vmem:[%s4 + $0x38] sm:$0xff]
          %v406 = vld [vmem:[%s4 + $0x40] sm:$0xff]
          %v407 = vld [vmem:[%s4 + $0x48] sm:$0xff]
          %v408 = vld [vmem:[%s4 + $0x50] sm:$0xff]
          %v409 = vld [vmem:[%s4 + $0x58] sm:$0xff]
          %v410 = vld [vmem:[%s4 + $0x60] sm:$0xff]
          %v411 = vld [vmem:[%s4 + $0x68] sm:$0xff]
          %v412 = vld [vmem:[%s4 + $0x70] sm:$0xff]
          %v413 = vld [vmem:[%s4 + $0x78] sm:$0xff]
          %v414 = vld [vmem:[%s386] sm:$0xff]
          %v415 = vld [vmem:[%s386 + $0x8] sm:$0xff]
          %v416 = vld [vmem:[%s386 + $0x10] sm:$0xff]
          %v417 = vld [vmem:[%s386 + $0x18] sm:$0xff]
          %v418 = vld [vmem:[%s5] sm:$0xff]
          %v419 = vld [vmem:[%s5 + $0x8] sm:$0xff]
          %v420 = vld [vmem:[%s5 + $0x10] sm:$0xff]
          %v421 = vld [vmem:[%s5 + $0x18] sm:$0xff]
          %v422 = vld [vmem:[%s5 + $0x20] sm:$0xff]
          %v423 = vld [vmem:[%s5 + $0x28] sm:$0xff]
          %v424 = vld [vmem:[%s5 + $0x30] sm:$0xff]
          %v425 = vld [vmem:[%s5 + $0x38] sm:$0xff]
          %v426 = vld [vmem:[%s5 + $0x40] sm:$0xff]
          %v427 = vld [vmem:[%s5 + $0x48] sm:$0xff]
          %v428 = vld [vmem:[%s5 + $0x50] sm:$0xff]
          %v429 = vld [vmem:[%s5 + $0x58] sm:$0xff]
          %v430 = vld [vmem:[%s5 + $0x60] sm:$0xff]
          %v431 = vld [vmem:[%s5 + $0x68] sm:$0xff]
          %v432 = vld [vmem:[%s5 + $0x70] sm:$0xff]
          %v433 = vld [vmem:[%s5 + $0x78] sm:$0xff]
          %435 = vset.pattern.permute.xlu0 0
          %436 = vperm.xlu0 %435, %v418
          %v437 = vpop.permute.xlu0 %436
          %440 = vset.pattern.permute.xlu0 0
          %441 = vperm.xlu0 %440, %v419
          %v442 = vpop.permute.xlu0 %441
          %445 = vset.pattern.permute.xlu0 0
          %446 = vperm.xlu0 %445, %v420
          %v447 = vpop.permute.xlu0 %446
          %450 = vset.pattern.permute.xlu0 0
          %451 = vperm.xlu0 %450, %v421
          %v452 = vpop.permute.xlu0 %451
          %455 = vset.pattern.permute.xlu0 0
          %456 = vperm.xlu0 %455, %v422
          %v457 = vpop.permute.xlu0 %456
          %460 = vset.pattern.permute.xlu0 0
          %461 = vperm.xlu0 %460, %v423
          %v462 = vpop.permute.xlu0 %461
          %465 = vset.pattern.permute.xlu0 0
          %466 = vperm.xlu0 %465, %v424
          %v467 = vpop.permute.xlu0 %466
          %470 = vset.pattern.permute.xlu0 0
          %471 = vperm.xlu0 %470, %v425
          %v472 = vpop.permute.xlu0 %471
          %475 = vset.pattern.permute.xlu0 0
          %476 = vperm.xlu0 %475, %v426
          %v477 = vpop.permute.xlu0 %476
          %480 = vset.pattern.permute.xlu0 0
          %481 = vperm.xlu0 %480, %v427
          %v482 = vpop.permute.xlu0 %481
          %485 = vset.pattern.permute.xlu0 0
          %486 = vperm.xlu0 %485, %v428
          %v487 = vpop.permute.xlu0 %486
          %490 = vset.pattern.permute.xlu0 0
          %491 = vperm.xlu0 %490, %v429
          %v492 = vpop.permute.xlu0 %491
          %495 = vset.pattern.permute.xlu0 0
          %496 = vperm.xlu0 %495, %v430
          %v497 = vpop.permute.xlu0 %496
          %500 = vset.pattern.permute.xlu0 0
          %501 = vperm.xlu0 %500, %v431
          %v502 = vpop.permute.xlu0 %501
          %505 = vset.pattern.permute.xlu0 0
          %506 = vperm.xlu0 %505, %v432
          %v507 = vpop.permute.xlu0 %506
          %510 = vset.pattern.permute.xlu0 0
          %511 = vperm.xlu0 %510, %v433
          %v512 = vpop.permute.xlu0 %511
          %vm514 = vcmask 261120
          %v516 = vsel %vm514, %v398, 0
          %v519 = vsel %vm514, %v399, 0
          %v522 = vsel %vm514, %v400, 0
          %v525 = vsel %vm514, %v401, 0
          %v528 = vsel %vm514, %v402, 0
          %v531 = vsel %vm514, %v403, 0
          %v534 = vsel %vm514, %v404, 0
          %v537 = vsel %vm514, %v405, 0
          %v540 = vsel %vm514, %v406, 0
          %v543 = vsel %vm514, %v407, 0
          %v546 = vsel %vm514, %v408, 0
          %v549 = vsel %vm514, %v409, 0
          %v552 = vsel %vm514, %v410, 0
          %v555 = vsel %vm514, %v411, 0
          %v558 = vsel %vm514, %v412, 0
          %v561 = vsel %vm514, %v413, 0
          %563 = vmatpush.msra.mxu0 0.0
          %564 = vmatpush.msra.mxu0 0.0
          %565 = vmatpush.msra.mxu0 0.0
          %566 = vmatpush.msra.mxu0 0.0
          %567 = vmatpush.msra.mxu0 0.0
          %568 = vmatpush.msra.mxu0 0.0
          %569 = vmatpush.msra.mxu0 0.0
          %570 = vmatpush.msra.mxu0 0.0
          %571 = vmatpush.msra.mxu0 0.0
          %572 = vmatpush.msra.mxu0 0.0
          %573 = vmatpush.msra.mxu0 0.0
          %574 = vmatpush.msra.mxu0 0.0
          %575 = vmatpush.msra.mxu0 %v417
          %576 = vmatpush.msra.mxu0 %v416
          %577 = vmatpush.msra.mxu0 %v415
          %578 = vmatpush.msra.mxu0 %v414
          %579 = vmatmul.f32.gmra.mxu0 %v516
          %v580 = vpop.f32.mrf.mxu0
          %v581 = vadd.f32 %v437, %v580
          %582 = vmatmul.f32.gmra.mxu0 %v519
          %v583 = vpop.f32.mrf.mxu0
          %v584 = vadd.f32 %v442, %v583
          %585 = vmatmul.f32.gmra.mxu0 %v522
          %v586 = vpop.f32.mrf.mxu0
          %v587 = vadd.f32 %v447, %v586
          %588 = vmatmul.f32.gmra.mxu0 %v525
          %v589 = vpop.f32.mrf.mxu0
          %v590 = vadd.f32 %v452, %v589
          %591 = vmatmul.f32.gmra.mxu0 %v528
          %v592 = vpop.f32.mrf.mxu0
          %v593 = vadd.f32 %v457, %v592
          %594 = vmatmul.f32.gmra.mxu0 %v531
          %v595 = vpop.f32.mrf.mxu0
          %v596 = vadd.f32 %v462, %v595
          %597 = vmatmul.f32.gmra.mxu0 %v534
          %v598 = vpop.f32.mrf.mxu0
          %v599 = vadd.f32 %v467, %v598
          %600 = vmatmul.f32.gmra.mxu0 %v537
          %v601 = vpop.f32.mrf.mxu0
          %v602 = vadd.f32 %v472, %v601
          %603 = vmatmul.f32.gmra.mxu0 %v540
          %v604 = vpop.f32.mrf.mxu0
          %v605 = vadd.f32 %v477, %v604
          %606 = vmatmul.f32.gmra.mxu0 %v543
          %v607 = vpop.f32.mrf.mxu0
          %v608 = vadd.f32 %v482, %v607
          %609 = vmatmul.f32.gmra.mxu0 %v546
          %v610 = vpop.f32.mrf.mxu0
          %v611 = vadd.f32 %v487, %v610
          %612 = vmatmul.f32.gmra.mxu0 %v549
          %v613 = vpop.f32.mrf.mxu0
          %v614 = vadd.f32 %v492, %v613
          %615 = vmatmul.f32.gmra.mxu0 %v552
          %v616 = vpop.f32.mrf.mxu0
          %v617 = vadd.f32 %v497, %v616
          %618 = vmatmul.f32.gmra.mxu0 %v555
          %v619 = vpop.f32.mrf.mxu0
          %v620 = vadd.f32 %v502, %v619
          %621 = vmatmul.f32.gmra.mxu0 %v558
          %v622 = vpop.f32.mrf.mxu0
          %v623 = vadd.f32 %v507, %v622
          %624 = vmatmul.f32.gmra.mxu0 %v561
          %v625 = vpop.f32.mrf.mxu0
          %v626 = vadd.f32 %v512, %v625
          %627 = vdwg.mxu0
          %628 = vst [vmem:[#allocation2] sm:$0xff] %v581
          %629 = vst [vmem:[#allocation2 + $0x8] sm:$0xff] %v584
          %630 = vst [vmem:[#allocation2 + $0x10] sm:$0xff] %v587
          %631 = vst [vmem:[#allocation2 + $0x18] sm:$0xff] %v590
          %632 = vst [vmem:[#allocation2 + $0x20] sm:$0xff] %v593
          %633 = vst [vmem:[#allocation2 + $0x28] sm:$0xff] %v596
          %634 = vst [vmem:[#allocation2 + $0x30] sm:$0xff] %v599
          %635 = vst [vmem:[#allocation2 + $0x38] sm:$0xff] %v602
          %636 = vst [vmem:[#allocation2 + $0x40] sm:$0xff] %v605
          %637 = vst [vmem:[#allocation2 + $0x48] sm:$0xff] %v608
          %638 = vst [vmem:[#allocation2 + $0x50] sm:$0xff] %v611
          %639 = vst [vmem:[#allocation2 + $0x58] sm:$0xff] %v614
          %640 = vst [vmem:[#allocation2 + $0x60] sm:$0xff] %v617
          %641 = vst [vmem:[#allocation2 + $0x68] sm:$0xff] %v620
          %642 = vst [vmem:[#allocation2 + $0x70] sm:$0xff] %v623
          %643 = vst [vmem:[#allocation2 + $0x78] sm:$0xff] %v626
        $region56: #{tpu_custom_call.1} parent=51 // pred_fallthru
          _
        %v644 = vld [vmem:[%s381] sm:$0xff]
        %v645 = vld [vmem:[%s2] sm:$0xff]
        %v646 = vld [vmem:[%s2 + $0x8] sm:$0xff]
        %v647 = vld [vmem:[%s2 + $0x10] sm:$0xff]
        %v648 = vld [vmem:[%s2 + $0x18] sm:$0xff]
        %v649 = vld [vmem:[%s3] sm:$0x1]
        %v651 = vperm.slane %v649, 0
        %vm653 = vcmask 261120
        %v655 = vsel %vm653, %v644, 0
        %657 = vmatpush.msra.mxu0 0.0
        %658 = vmatpush.msra.mxu0 0.0
        %659 = vmatpush.msra.mxu0 0.0
        %660 = vmatpush.msra.mxu0 0.0
        %661 = vmatpush.msra.mxu0 0.0
        %662 = vmatpush.msra.mxu0 0.0
        %663 = vmatpush.msra.mxu0 0.0
        %664 = vmatpush.msra.mxu0 0.0
        %665 = vmatpush.msra.mxu0 0.0
        %666 = vmatpush.msra.mxu0 0.0
        %667 = vmatpush.msra.mxu0 0.0
        %668 = vmatpush.msra.mxu0 0.0
        %669 = vmatpush.msra.mxu0 %v648
        %670 = vmatpush.msra.mxu0 %v647
        %671 = vmatpush.msra.mxu0 %v646
        %672 = vmatpush.msra.mxu0 %v645
        %673 = vmatmul.f32.gmra.mxu0 %v655
        %v674 = vpop.f32.mrf.mxu0
        %v675 = vadd.f32 %v651, %v674
        %676 = vdwg.mxu0
        %v677 = vperm.slane %v675, 0
        %v678 = vlaneseq
        %v679 = vshrl.u32 %v678, 7
        %681 = vset.pattern.permute.xlu0 %v679
        %682 = vperm.xlu0 %681, %v677
        %v683 = vpop.permute.xlu0 %682
        %v684 = vlaneseq
        %v685 = vshrl.u32 %v684, 7
        %v686 = vadd.s32 %v685, 8
        %687 = vset.pattern.permute.xlu0 %v686
        %688 = vperm.xlu0 %687, %v677
        %v689 = vpop.permute.xlu0 %688
        %v690 = vlaneseq
        %v691 = vshrl.u32 %v690, 7
        %v692 = vadd.s32 %v691, 16
        %693 = vset.pattern.permute.xlu0 %v692
        %694 = vperm.xlu0 %693, %v677
        %v695 = vpop.permute.xlu0 %694
        %v696 = vlaneseq
        %v697 = vshrl.u32 %v696, 7
        %v698 = vadd.s32 %v697, 24
        %699 = vset.pattern.permute.xlu0 %v698
        %700 = vperm.xlu0 %699, %v677
        %v701 = vpop.permute.xlu0 %700
        %v702 = vlaneseq
        %v703 = vshrl.u32 %v702, 7
        %v704 = vadd.s32 %v703, 32
        %705 = vset.pattern.permute.xlu0 %v704
        %706 = vperm.xlu0 %705, %v677
        %v707 = vpop.permute.xlu0 %706
        %v708 = vlaneseq
        %v709 = vshrl.u32 %v708, 7
        %v710 = vadd.s32 %v709, 40
        %711 = vset.pattern.permute.xlu0 %v710
        %712 = vperm.xlu0 %711, %v677
        %v713 = vpop.permute.xlu0 %712
        %v714 = vlaneseq
        %v715 = vshrl.u32 %v714, 7
        %v716 = vadd.s32 %v715, 48
        %717 = vset.pattern.permute.xlu0 %v716
        %718 = vperm.xlu0 %717, %v677
        %v719 = vpop.permute.xlu0 %718
        %v720 = vlaneseq
        %v721 = vshrl.u32 %v720, 7
        %v722 = vadd.s32 %v721, 56
        %723 = vset.pattern.permute.xlu0 %v722
        %724 = vperm.xlu0 %723, %v677
        %v725 = vpop.permute.xlu0 %724
        %v726 = vlaneseq
        %v727 = vshrl.u32 %v726, 7
        %v728 = vadd.s32 %v727, 64
        %729 = vset.pattern.permute.xlu0 %v728
        %730 = vperm.xlu0 %729, %v677
        %v731 = vpop.permute.xlu0 %730
        %v732 = vlaneseq
        %v733 = vshrl.u32 %v732, 7
        %v734 = vadd.s32 %v733, 72
        %735 = vset.pattern.permute.xlu0 %v734
        %736 = vperm.xlu0 %735, %v677
        %v737 = vpop.permute.xlu0 %736
        %v738 = vlaneseq
        %v739 = vshrl.u32 %v738, 7
        %v740 = vadd.s32 %v739, 80
        %741 = vset.pattern.permute.xlu0 %v740
        %742 = vperm.xlu0 %741, %v677
        %v743 = vpop.permute.xlu0 %742
        %v744 = vlaneseq
        %v745 = vshrl.u32 %v744, 7
        %v746 = vadd.s32 %v745, 88
        %747 = vset.pattern.permute.xlu0 %v746
        %748 = vperm.xlu0 %747, %v677
        %v749 = vpop.permute.xlu0 %748
        %v750 = vlaneseq
        %v751 = vshrl.u32 %v750, 7
        %v752 = vadd.s32 %v751, 96
        %753 = vset.pattern.permute.xlu0 %v752
        %754 = vperm.xlu0 %753, %v677
        %v755 = vpop.permute.xlu0 %754
        %v756 = vlaneseq
        %v757 = vshrl.u32 %v756, 7
        %v758 = vadd.s32 %v757, 104
        %759 = vset.pattern.permute.xlu0 %v758
        %760 = vperm.xlu0 %759, %v677
        %v761 = vpop.permute.xlu0 %760
        %v762 = vlaneseq
        %v763 = vshrl.u32 %v762, 7
        %v764 = vadd.s32 %v763, 112
        %765 = vset.pattern.permute.xlu0 %v764
        %766 = vperm.xlu0 %765, %v677
        %v767 = vpop.permute.xlu0 %766
        %v768 = vlaneseq
        %v769 = vshrl.u32 %v768, 7
        %v770 = vadd.s32 %v769, 120
        %771 = vset.pattern.permute.xlu0 %v770
        %772 = vperm.xlu0 %771, %v677
        %v773 = vpop.permute.xlu0 %772
        %v774 = vperm.slane %v675, 1
        %v775 = vlaneseq
        %v776 = vshrl.u32 %v775, 7
        %778 = vset.pattern.permute.xlu0 %v776
        %779 = vperm.xlu0 %778, %v774
        %v780 = vpop.permute.xlu0 %779
        %v781 = vlaneseq
        %v782 = vshrl.u32 %v781, 7
        %v783 = vadd.s32 %v782, 8
        %784 = vset.pattern.permute.xlu0 %v783
        %785 = vperm.xlu0 %784, %v774
        %v786 = vpop.permute.xlu0 %785
        %v787 = vlaneseq
        %v788 = vshrl.u32 %v787, 7
        %v789 = vadd.s32 %v788, 16
        %790 = vset.pattern.permute.xlu0 %v789
        %791 = vperm.xlu0 %790, %v774
        %v792 = vpop.permute.xlu0 %791
        %v793 = vlaneseq
        %v794 = vshrl.u32 %v793, 7
        %v795 = vadd.s32 %v794, 24
        %796 = vset.pattern.permute.xlu0 %v795
        %797 = vperm.xlu0 %796, %v774
        %v798 = vpop.permute.xlu0 %797
        %v799 = vlaneseq
        %v800 = vshrl.u32 %v799, 7
        %v801 = vadd.s32 %v800, 32
        %802 = vset.pattern.permute.xlu0 %v801
        %803 = vperm.xlu0 %802, %v774
        %v804 = vpop.permute.xlu0 %803
        %v805 = vlaneseq
        %v806 = vshrl.u32 %v805, 7
        %v807 = vadd.s32 %v806, 40
        %808 = vset.pattern.permute.xlu0 %v807
        %809 = vperm.xlu0 %808, %v774
        %v810 = vpop.permute.xlu0 %809
        %v811 = vlaneseq
        %v812 = vshrl.u32 %v811, 7
        %v813 = vadd.s32 %v812, 48
        %814 = vset.pattern.permute.xlu0 %v813
        %815 = vperm.xlu0 %814, %v774
        %v816 = vpop.permute.xlu0 %815
        %v817 = vlaneseq
        %v818 = vshrl.u32 %v817, 7
        %v819 = vadd.s32 %v818, 56
        %820 = vset.pattern.permute.xlu0 %v819
        %821 = vperm.xlu0 %820, %v774
        %v822 = vpop.permute.xlu0 %821
        %v823 = vlaneseq
        %v824 = vshrl.u32 %v823, 7
        %v825 = vadd.s32 %v824, 64
        %826 = vset.pattern.permute.xlu0 %v825
        %827 = vperm.xlu0 %826, %v774
        %v828 = vpop.permute.xlu0 %827
        %v829 = vlaneseq
        %v830 = vshrl.u32 %v829, 7
        %v831 = vadd.s32 %v830, 72
        %832 = vset.pattern.permute.xlu0 %v831
        %833 = vperm.xlu0 %832, %v774
        %v834 = vpop.permute.xlu0 %833
        %v835 = vlaneseq
        %v836 = vshrl.u32 %v835, 7
        %v837 = vadd.s32 %v836, 80
        %838 = vset.pattern.permute.xlu0 %v837
        %839 = vperm.xlu0 %838, %v774
        %v840 = vpop.permute.xlu0 %839
        %v841 = vlaneseq
        %v842 = vshrl.u32 %v841, 7
        %v843 = vadd.s32 %v842, 88
        %844 = vset.pattern.permute.xlu0 %v843
        %845 = vperm.xlu0 %844, %v774
        %v846 = vpop.permute.xlu0 %845
        %v847 = vlaneseq
        %v848 = vshrl.u32 %v847, 7
        %v849 = vadd.s32 %v848, 96
        %850 = vset.pattern.permute.xlu0 %v849
        %851 = vperm.xlu0 %850, %v774
        %v852 = vpop.permute.xlu0 %851
        %v853 = vlaneseq
        %v854 = vshrl.u32 %v853, 7
        %v855 = vadd.s32 %v854, 104
        %856 = vset.pattern.permute.xlu0 %v855
        %857 = vperm.xlu0 %856, %v774
        %v858 = vpop.permute.xlu0 %857
        %v859 = vlaneseq
        %v860 = vshrl.u32 %v859, 7
        %v861 = vadd.s32 %v860, 112
        %862 = vset.pattern.permute.xlu0 %v861
        %863 = vperm.xlu0 %862, %v774
        %v864 = vpop.permute.xlu0 %863
        %v865 = vlaneseq
        %v866 = vshrl.u32 %v865, 7
        %v867 = vadd.s32 %v866, 120
        %868 = vset.pattern.permute.xlu0 %v867
        %869 = vperm.xlu0 %868, %v774
        %v870 = vpop.permute.xlu0 %869
        %v871 = vperm.slane %v675, 2
        %v872 = vlaneseq
        %v873 = vshrl.u32 %v872, 7
        %875 = vset.pattern.permute.xlu0 %v873
        %876 = vperm.xlu0 %875, %v871
        %v877 = vpop.permute.xlu0 %876
        %v878 = vlaneseq
        %v879 = vshrl.u32 %v878, 7
        %v880 = vadd.s32 %v879, 8
        %881 = vset.pattern.permute.xlu0 %v880
        %882 = vperm.xlu0 %881, %v871
        %v883 = vpop.permute.xlu0 %882
        %v884 = vlaneseq
        %v885 = vshrl.u32 %v884, 7
        %v886 = vadd.s32 %v885, 16
        %887 = vset.pattern.permute.xlu0 %v886
        %888 = vperm.xlu0 %887, %v871
        %v889 = vpop.permute.xlu0 %888
        %v890 = vlaneseq
        %v891 = vshrl.u32 %v890, 7
        %v892 = vadd.s32 %v891, 24
        %893 = vset.pattern.permute.xlu0 %v892
        %894 = vperm.xlu0 %893, %v871
        %v895 = vpop.permute.xlu0 %894
        %v896 = vlaneseq
        %v897 = vshrl.u32 %v896, 7
        %v898 = vadd.s32 %v897, 32
        %899 = vset.pattern.permute.xlu0 %v898
        %900 = vperm.xlu0 %899, %v871
        %v901 = vpop.permute.xlu0 %900
        %v902 = vlaneseq
        %v903 = vshrl.u32 %v902, 7
        %v904 = vadd.s32 %v903, 40
        %905 = vset.pattern.permute.xlu0 %v904
        %906 = vperm.xlu0 %905, %v871
        %v907 = vpop.permute.xlu0 %906
        %v908 = vlaneseq
        %v909 = vshrl.u32 %v908, 7
        %v910 = vadd.s32 %v909, 48
        %911 = vset.pattern.permute.xlu0 %v910
        %912 = vperm.xlu0 %911, %v871
        %v913 = vpop.permute.xlu0 %912
        %v914 = vlaneseq
        %v915 = vshrl.u32 %v914, 7
        %v916 = vadd.s32 %v915, 56
        %917 = vset.pattern.permute.xlu0 %v916
        %918 = vperm.xlu0 %917, %v871
        %v919 = vpop.permute.xlu0 %918
        %v920 = vlaneseq
        %v921 = vshrl.u32 %v920, 7
        %v922 = vadd.s32 %v921, 64
        %923 = vset.pattern.permute.xlu0 %v922
        %924 = vperm.xlu0 %923, %v871
        %v925 = vpop.permute.xlu0 %924
        %v926 = vlaneseq
        %v927 = vshrl.u32 %v926, 7
        %v928 = vadd.s32 %v927, 72
        %929 = vset.pattern.permute.xlu0 %v928
        %930 = vperm.xlu0 %929, %v871
        %v931 = vpop.permute.xlu0 %930
        %v932 = vlaneseq
        %v933 = vshrl.u32 %v932, 7
        %v934 = vadd.s32 %v933, 80
        %935 = vset.pattern.permute.xlu0 %v934
        %936 = vperm.xlu0 %935, %v871
        %v937 = vpop.permute.xlu0 %936
        %v938 = vlaneseq
        %v939 = vshrl.u32 %v938, 7
        %v940 = vadd.s32 %v939, 88
        %941 = vset.pattern.permute.xlu0 %v940
        %942 = vperm.xlu0 %941, %v871
        %v943 = vpop.permute.xlu0 %942
        %v944 = vlaneseq
        %v945 = vshrl.u32 %v944, 7
        %v946 = vadd.s32 %v945, 96
        %947 = vset.pattern.permute.xlu0 %v946
        %948 = vperm.xlu0 %947, %v871
        %v949 = vpop.permute.xlu0 %948
        %v950 = vlaneseq
        %v951 = vshrl.u32 %v950, 7
        %v952 = vadd.s32 %v951, 104
        %953 = vset.pattern.permute.xlu0 %v952
        %954 = vperm.xlu0 %953, %v871
        %v955 = vpop.permute.xlu0 %954
        %v956 = vlaneseq
        %v957 = vshrl.u32 %v956, 7
        %v958 = vadd.s32 %v957, 112
        %959 = vset.pattern.permute.xlu0 %v958
        %960 = vperm.xlu0 %959, %v871
        %v961 = vpop.permute.xlu0 %960
        %v962 = vlaneseq
        %v963 = vshrl.u32 %v962, 7
        %v964 = vadd.s32 %v963, 120
        %965 = vset.pattern.permute.xlu0 %v964
        %966 = vperm.xlu0 %965, %v871
        %v967 = vpop.permute.xlu0 %966
        %v968 = vperm.slane %v675, 3
        %v969 = vlaneseq
        %v970 = vshrl.u32 %v969, 7
        %972 = vset.pattern.permute.xlu0 %v970
        %973 = vperm.xlu0 %972, %v968
        %v974 = vpop.permute.xlu0 %973
        %v975 = vlaneseq
        %v976 = vshrl.u32 %v975, 7
        %v977 = vadd.s32 %v976, 8
        %978 = vset.pattern.permute.xlu0 %v977
        %979 = vperm.xlu0 %978, %v968
        %v980 = vpop.permute.xlu0 %979
        %v981 = vlaneseq
        %v982 = vshrl.u32 %v981, 7
        %v983 = vadd.s32 %v982, 16
        %984 = vset.pattern.permute.xlu0 %v983
        %985 = vperm.xlu0 %984, %v968
        %v986 = vpop.permute.xlu0 %985
        %v987 = vlaneseq
        %v988 = vshrl.u32 %v987, 7
        %v989 = vadd.s32 %v988, 24
        %990 = vset.pattern.permute.xlu0 %v989
        %991 = vperm.xlu0 %990, %v968
        %v992 = vpop.permute.xlu0 %991
        %v993 = vlaneseq
        %v994 = vshrl.u32 %v993, 7
        %v995 = vadd.s32 %v994, 32
        %996 = vset.pattern.permute.xlu0 %v995
        %997 = vperm.xlu0 %996, %v968
        %v998 = vpop.permute.xlu0 %997
        %v999 = vlaneseq
        %v1000 = vshrl.u32 %v999, 7
        %v1001 = vadd.s32 %v1000, 40
        %1002 = vset.pattern.permute.xlu0 %v1001
        %1003 = vperm.xlu0 %1002, %v968
        %v1004 = vpop.permute.xlu0 %1003
        %v1005 = vlaneseq
        %v1006 = vshrl.u32 %v1005, 7
        %v1007 = vadd.s32 %v1006, 48
        %1008 = vset.pattern.permute.xlu0 %v1007
        %1009 = vperm.xlu0 %1008, %v968
        %v1010 = vpop.permute.xlu0 %1009
        %v1011 = vlaneseq
        %v1012 = vshrl.u32 %v1011, 7
        %v1013 = vadd.s32 %v1012, 56
        %1014 = vset.pattern.permute.xlu0 %v1013
        %1015 = vperm.xlu0 %1014, %v968
        %v1016 = vpop.permute.xlu0 %1015
        %v1017 = vlaneseq
        %v1018 = vshrl.u32 %v1017, 7
        %v1019 = vadd.s32 %v1018, 64
        %1020 = vset.pattern.permute.xlu0 %v1019
        %1021 = vperm.xlu0 %1020, %v968
        %v1022 = vpop.permute.xlu0 %1021
        %v1023 = vlaneseq
        %v1024 = vshrl.u32 %v1023, 7
        %v1025 = vadd.s32 %v1024, 72
        %1026 = vset.pattern.permute.xlu0 %v1025
        %1027 = vperm.xlu0 %1026, %v968
        %v1028 = vpop.permute.xlu0 %1027
        %v1029 = vlaneseq
        %v1030 = vshrl.u32 %v1029, 7
        %v1031 = vadd.s32 %v1030, 80
        %1032 = vset.pattern.permute.xlu0 %v1031
        %1033 = vperm.xlu0 %1032, %v968
        %v1034 = vpop.permute.xlu0 %1033
        %v1035 = vlaneseq
        %v1036 = vshrl.u32 %v1035, 7
        %v1037 = vadd.s32 %v1036, 88
        %1038 = vset.pattern.permute.xlu0 %v1037
        %1039 = vperm.xlu0 %1038, %v968
        %v1040 = vpop.permute.xlu0 %1039
        %v1041 = vlaneseq
        %v1042 = vshrl.u32 %v1041, 7
        %v1043 = vadd.s32 %v1042, 96
        %1044 = vset.pattern.permute.xlu0 %v1043
        %1045 = vperm.xlu0 %1044, %v968
        %v1046 = vpop.permute.xlu0 %1045
        %v1047 = vlaneseq
        %v1048 = vshrl.u32 %v1047, 7
        %v1049 = vadd.s32 %v1048, 104
        %1050 = vset.pattern.permute.xlu0 %v1049
        %1051 = vperm.xlu0 %1050, %v968
        %v1052 = vpop.permute.xlu0 %1051
        %v1053 = vlaneseq
        %v1054 = vshrl.u32 %v1053, 7
        %v1055 = vadd.s32 %v1054, 112
        %1056 = vset.pattern.permute.xlu0 %v1055
        %1057 = vperm.xlu0 %1056, %v968
        %v1058 = vpop.permute.xlu0 %1057
        %v1059 = vlaneseq
        %v1060 = vshrl.u32 %v1059, 7
        %v1061 = vadd.s32 %v1060, 120
        %1062 = vset.pattern.permute.xlu0 %v1061
        %1063 = vperm.xlu0 %1062, %v968
        %v1064 = vpop.permute.xlu0 %1063
        %v1065 = vperm.slane %v675, 4
        %v1066 = vlaneseq
        %v1067 = vshrl.u32 %v1066, 7
        %1069 = vset.pattern.permute.xlu0 %v1067
        %1070 = vperm.xlu0 %1069, %v1065
        %v1071 = vpop.permute.xlu0 %1070
        %v1072 = vlaneseq
        %v1073 = vshrl.u32 %v1072, 7
        %v1074 = vadd.s32 %v1073, 8
        %1075 = vset.pattern.permute.xlu0 %v1074
        %1076 = vperm.xlu0 %1075, %v1065
        %v1077 = vpop.permute.xlu0 %1076
        %v1078 = vlaneseq
        %v1079 = vshrl.u32 %v1078, 7
        %v1080 = vadd.s32 %v1079, 16
        %1081 = vset.pattern.permute.xlu0 %v1080
        %1082 = vperm.xlu0 %1081, %v1065
        %v1083 = vpop.permute.xlu0 %1082
        %v1084 = vlaneseq
        %v1085 = vshrl.u32 %v1084, 7
        %v1086 = vadd.s32 %v1085, 24
        %1087 = vset.pattern.permute.xlu0 %v1086
        %1088 = vperm.xlu0 %1087, %v1065
        %v1089 = vpop.permute.xlu0 %1088
        %v1090 = vlaneseq
        %v1091 = vshrl.u32 %v1090, 7
        %v1092 = vadd.s32 %v1091, 32
        %1093 = vset.pattern.permute.xlu0 %v1092
        %1094 = vperm.xlu0 %1093, %v1065
        %v1095 = vpop.permute.xlu0 %1094
        %v1096 = vlaneseq
        %v1097 = vshrl.u32 %v1096, 7
        %v1098 = vadd.s32 %v1097, 40
        %1099 = vset.pattern.permute.xlu0 %v1098
        %1100 = vperm.xlu0 %1099, %v1065
        %v1101 = vpop.permute.xlu0 %1100
        %v1102 = vlaneseq
        %v1103 = vshrl.u32 %v1102, 7
        %v1104 = vadd.s32 %v1103, 48
        %1105 = vset.pattern.permute.xlu0 %v1104
        %1106 = vperm.xlu0 %1105, %v1065
        %v1107 = vpop.permute.xlu0 %1106
        %v1108 = vlaneseq
        %v1109 = vshrl.u32 %v1108, 7
        %v1110 = vadd.s32 %v1109, 56
        %1111 = vset.pattern.permute.xlu0 %v1110
        %1112 = vperm.xlu0 %1111, %v1065
        %v1113 = vpop.permute.xlu0 %1112
        %v1114 = vlaneseq
        %v1115 = vshrl.u32 %v1114, 7
        %v1116 = vadd.s32 %v1115, 64
        %1117 = vset.pattern.permute.xlu0 %v1116
        %1118 = vperm.xlu0 %1117, %v1065
        %v1119 = vpop.permute.xlu0 %1118
        %v1120 = vlaneseq
        %v1121 = vshrl.u32 %v1120, 7
        %v1122 = vadd.s32 %v1121, 72
        %1123 = vset.pattern.permute.xlu0 %v1122
        %1124 = vperm.xlu0 %1123, %v1065
        %v1125 = vpop.permute.xlu0 %1124
        %v1126 = vlaneseq
        %v1127 = vshrl.u32 %v1126, 7
        %v1128 = vadd.s32 %v1127, 80
        %1129 = vset.pattern.permute.xlu0 %v1128
        %1130 = vperm.xlu0 %1129, %v1065
        %v1131 = vpop.permute.xlu0 %1130
        %v1132 = vlaneseq
        %v1133 = vshrl.u32 %v1132, 7
        %v1134 = vadd.s32 %v1133, 88
        %1135 = vset.pattern.permute.xlu0 %v1134
        %1136 = vperm.xlu0 %1135, %v1065
        %v1137 = vpop.permute.xlu0 %1136
        %v1138 = vlaneseq
        %v1139 = vshrl.u32 %v1138, 7
        %v1140 = vadd.s32 %v1139, 96
        %1141 = vset.pattern.permute.xlu0 %v1140
        %1142 = vperm.xlu0 %1141, %v1065
        %v1143 = vpop.permute.xlu0 %1142
        %v1144 = vlaneseq
        %v1145 = vshrl.u32 %v1144, 7
        %v1146 = vadd.s32 %v1145, 104
        %1147 = vset.pattern.permute.xlu0 %v1146
        %1148 = vperm.xlu0 %1147, %v1065
        %v1149 = vpop.permute.xlu0 %1148
        %v1150 = vlaneseq
        %v1151 = vshrl.u32 %v1150, 7
        %v1152 = vadd.s32 %v1151, 112
        %1153 = vset.pattern.permute.xlu0 %v1152
        %1154 = vperm.xlu0 %1153, %v1065
        %v1155 = vpop.permute.xlu0 %1154
        %v1156 = vlaneseq
        %v1157 = vshrl.u32 %v1156, 7
        %v1158 = vadd.s32 %v1157, 120
        %1159 = vset.pattern.permute.xlu0 %v1158
        %1160 = vperm.xlu0 %1159, %v1065
        %v1161 = vpop.permute.xlu0 %1160
        %v1162 = vperm.slane %v675, 5
        %v1163 = vlaneseq
        %v1164 = vshrl.u32 %v1163, 7
        %1166 = vset.pattern.permute.xlu0 %v1164
        %1167 = vperm.xlu0 %1166, %v1162
        %v1168 = vpop.permute.xlu0 %1167
        %v1169 = vlaneseq
        %v1170 = vshrl.u32 %v1169, 7
        %v1171 = vadd.s32 %v1170, 8
        %1172 = vset.pattern.permute.xlu0 %v1171
        %1173 = vperm.xlu0 %1172, %v1162
        %v1174 = vpop.permute.xlu0 %1173
        %v1175 = vlaneseq
        %v1176 = vshrl.u32 %v1175, 7
        %v1177 = vadd.s32 %v1176, 16
        %1178 = vset.pattern.permute.xlu0 %v1177
        %1179 = vperm.xlu0 %1178, %v1162
        %v1180 = vpop.permute.xlu0 %1179
        %v1181 = vlaneseq
        %v1182 = vshrl.u32 %v1181, 7
        %v1183 = vadd.s32 %v1182, 24
        %1184 = vset.pattern.permute.xlu0 %v1183
        %1185 = vperm.xlu0 %1184, %v1162
        %v1186 = vpop.permute.xlu0 %1185
        %v1187 = vlaneseq
        %v1188 = vshrl.u32 %v1187, 7
        %v1189 = vadd.s32 %v1188, 32
        %1190 = vset.pattern.permute.xlu0 %v1189
        %1191 = vperm.xlu0 %1190, %v1162
        %v1192 = vpop.permute.xlu0 %1191
        %v1193 = vlaneseq
        %v1194 = vshrl.u32 %v1193, 7
        %v1195 = vadd.s32 %v1194, 40
        %1196 = vset.pattern.permute.xlu0 %v1195
        %1197 = vperm.xlu0 %1196, %v1162
        %v1198 = vpop.permute.xlu0 %1197
        %v1199 = vlaneseq
        %v1200 = vshrl.u32 %v1199, 7
        %v1201 = vadd.s32 %v1200, 48
        %1202 = vset.pattern.permute.xlu0 %v1201
        %1203 = vperm.xlu0 %1202, %v1162
        %v1204 = vpop.permute.xlu0 %1203
        %v1205 = vlaneseq
        %v1206 = vshrl.u32 %v1205, 7
        %v1207 = vadd.s32 %v1206, 56
        %1208 = vset.pattern.permute.xlu0 %v1207
        %1209 = vperm.xlu0 %1208, %v1162
        %v1210 = vpop.permute.xlu0 %1209
        %v1211 = vlaneseq
        %v1212 = vshrl.u32 %v1211, 7
        %v1213 = vadd.s32 %v1212, 64
        %1214 = vset.pattern.permute.xlu0 %v1213
        %1215 = vperm.xlu0 %1214, %v1162
        %v1216 = vpop.permute.xlu0 %1215
        %v1217 = vlaneseq
        %v1218 = vshrl.u32 %v1217, 7
        %v1219 = vadd.s32 %v1218, 72
        %1220 = vset.pattern.permute.xlu0 %v1219
        %1221 = vperm.xlu0 %1220, %v1162
        %v1222 = vpop.permute.xlu0 %1221
        %v1223 = vlaneseq
        %v1224 = vshrl.u32 %v1223, 7
        %v1225 = vadd.s32 %v1224, 80
        %1226 = vset.pattern.permute.xlu0 %v1225
        %1227 = vperm.xlu0 %1226, %v1162
        %v1228 = vpop.permute.xlu0 %1227
        %v1229 = vlaneseq
        %v1230 = vshrl.u32 %v1229, 7
        %v1231 = vadd.s32 %v1230, 88
        %1232 = vset.pattern.permute.xlu0 %v1231
        %1233 = vperm.xlu0 %1232, %v1162
        %v1234 = vpop.permute.xlu0 %1233
        %v1235 = vlaneseq
        %v1236 = vshrl.u32 %v1235, 7
        %v1237 = vadd.s32 %v1236, 96
        %1238 = vset.pattern.permute.xlu0 %v1237
        %1239 = vperm.xlu0 %1238, %v1162
        %v1240 = vpop.permute.xlu0 %1239
        %v1241 = vlaneseq
        %v1242 = vshrl.u32 %v1241, 7
        %v1243 = vadd.s32 %v1242, 104
        %1244 = vset.pattern.permute.xlu0 %v1243
        %1245 = vperm.xlu0 %1244, %v1162
        %v1246 = vpop.permute.xlu0 %1245
        %v1247 = vlaneseq
        %v1248 = vshrl.u32 %v1247, 7
        %v1249 = vadd.s32 %v1248, 112
        %1250 = vset.pattern.permute.xlu0 %v1249
        %1251 = vperm.xlu0 %1250, %v1162
        %v1252 = vpop.permute.xlu0 %1251
        %v1253 = vlaneseq
        %v1254 = vshrl.u32 %v1253, 7
        %v1255 = vadd.s32 %v1254, 120
        %1256 = vset.pattern.permute.xlu0 %v1255
        %1257 = vperm.xlu0 %1256, %v1162
        %v1258 = vpop.permute.xlu0 %1257
        %v1259 = vperm.slane %v675, 6
        %v1260 = vlaneseq
        %v1261 = vshrl.u32 %v1260, 7
        %1263 = vset.pattern.permute.xlu0 %v1261
        %1264 = vperm.xlu0 %1263, %v1259
        %v1265 = vpop.permute.xlu0 %1264
        %v1266 = vlaneseq
        %v1267 = vshrl.u32 %v1266, 7
        %v1268 = vadd.s32 %v1267, 8
        %1269 = vset.pattern.permute.xlu0 %v1268
        %1270 = vperm.xlu0 %1269, %v1259
        %v1271 = vpop.permute.xlu0 %1270
        %v1272 = vlaneseq
        %v1273 = vshrl.u32 %v1272, 7
        %v1274 = vadd.s32 %v1273, 16
        %1275 = vset.pattern.permute.xlu0 %v1274
        %1276 = vperm.xlu0 %1275, %v1259
        %v1277 = vpop.permute.xlu0 %1276
        %v1278 = vlaneseq
        %v1279 = vshrl.u32 %v1278, 7
        %v1280 = vadd.s32 %v1279, 24
        %1281 = vset.pattern.permute.xlu0 %v1280
        %1282 = vperm.xlu0 %1281, %v1259
        %v1283 = vpop.permute.xlu0 %1282
        %v1284 = vlaneseq
        %v1285 = vshrl.u32 %v1284, 7
        %v1286 = vadd.s32 %v1285, 32
        %1287 = vset.pattern.permute.xlu0 %v1286
        %1288 = vperm.xlu0 %1287, %v1259
        %v1289 = vpop.permute.xlu0 %1288
        %v1290 = vlaneseq
        %v1291 = vshrl.u32 %v1290, 7
        %v1292 = vadd.s32 %v1291, 40
        %1293 = vset.pattern.permute.xlu0 %v1292
        %1294 = vperm.xlu0 %1293, %v1259
        %v1295 = vpop.permute.xlu0 %1294
        %v1296 = vlaneseq
        %v1297 = vshrl.u32 %v1296, 7
        %v1298 = vadd.s32 %v1297, 48
        %1299 = vset.pattern.permute.xlu0 %v1298
        %1300 = vperm.xlu0 %1299, %v1259
        %v1301 = vpop.permute.xlu0 %1300
        %v1302 = vlaneseq
        %v1303 = vshrl.u32 %v1302, 7
        %v1304 = vadd.s32 %v1303, 56
        %1305 = vset.pattern.permute.xlu0 %v1304
        %1306 = vperm.xlu0 %1305, %v1259
        %v1307 = vpop.permute.xlu0 %1306
        %v1308 = vlaneseq
        %v1309 = vshrl.u32 %v1308, 7
        %v1310 = vadd.s32 %v1309, 64
        %1311 = vset.pattern.permute.xlu0 %v1310
        %1312 = vperm.xlu0 %1311, %v1259
        %v1313 = vpop.permute.xlu0 %1312
        %v1314 = vlaneseq
        %v1315 = vshrl.u32 %v1314, 7
        %v1316 = vadd.s32 %v1315, 72
        %1317 = vset.pattern.permute.xlu0 %v1316
        %1318 = vperm.xlu0 %1317, %v1259
        %v1319 = vpop.permute.xlu0 %1318
        %v1320 = vlaneseq
        %v1321 = vshrl.u32 %v1320, 7
        %v1322 = vadd.s32 %v1321, 80
        %1323 = vset.pattern.permute.xlu0 %v1322
        %1324 = vperm.xlu0 %1323, %v1259
        %v1325 = vpop.permute.xlu0 %1324
        %v1326 = vlaneseq
        %v1327 = vshrl.u32 %v1326, 7
        %v1328 = vadd.s32 %v1327, 88
        %1329 = vset.pattern.permute.xlu0 %v1328
        %1330 = vperm.xlu0 %1329, %v1259
        %v1331 = vpop.permute.xlu0 %1330
        %v1332 = vlaneseq
        %v1333 = vshrl.u32 %v1332, 7
        %v1334 = vadd.s32 %v1333, 96
        %1335 = vset.pattern.permute.xlu0 %v1334
        %1336 = vperm.xlu0 %1335, %v1259
        %v1337 = vpop.permute.xlu0 %1336
        %v1338 = vlaneseq
        %v1339 = vshrl.u32 %v1338, 7
        %v1340 = vadd.s32 %v1339, 104
        %1341 = vset.pattern.permute.xlu0 %v1340
        %1342 = vperm.xlu0 %1341, %v1259
        %v1343 = vpop.permute.xlu0 %1342
        %v1344 = vlaneseq
        %v1345 = vshrl.u32 %v1344, 7
        %v1346 = vadd.s32 %v1345, 112
        %1347 = vset.pattern.permute.xlu0 %v1346
        %1348 = vperm.xlu0 %1347, %v1259
        %v1349 = vpop.permute.xlu0 %1348
        %v1350 = vlaneseq
        %v1351 = vshrl.u32 %v1350, 7
        %v1352 = vadd.s32 %v1351, 120
        %1353 = vset.pattern.permute.xlu0 %v1352
        %1354 = vperm.xlu0 %1353, %v1259
        %v1355 = vpop.permute.xlu0 %1354
        %v1356 = vperm.slane %v675, 7
        %v1357 = vlaneseq
        %v1358 = vshrl.u32 %v1357, 7
        %1360 = vset.pattern.permute.xlu0 %v1358
        %1361 = vperm.xlu0 %1360, %v1356
        %v1362 = vpop.permute.xlu0 %1361
        %v1363 = vlaneseq
        %v1364 = vshrl.u32 %v1363, 7
        %v1365 = vadd.s32 %v1364, 8
        %1366 = vset.pattern.permute.xlu0 %v1365
        %1367 = vperm.xlu0 %1366, %v1356
        %v1368 = vpop.permute.xlu0 %1367
        %v1369 = vlaneseq
        %v1370 = vshrl.u32 %v1369, 7
        %v1371 = vadd.s32 %v1370, 16
        %1372 = vset.pattern.permute.xlu0 %v1371
        %1373 = vperm.xlu0 %1372, %v1356
        %v1374 = vpop.permute.xlu0 %1373
        %v1375 = vlaneseq
        %v1376 = vshrl.u32 %v1375, 7
        %v1377 = vadd.s32 %v1376, 24
        %1378 = vset.pattern.permute.xlu0 %v1377
        %1379 = vperm.xlu0 %1378, %v1356
        %v1380 = vpop.permute.xlu0 %1379
        %v1381 = vlaneseq
        %v1382 = vshrl.u32 %v1381, 7
        %v1383 = vadd.s32 %v1382, 32
        %1384 = vset.pattern.permute.xlu0 %v1383
        %1385 = vperm.xlu0 %1384, %v1356
        %v1386 = vpop.permute.xlu0 %1385
        %v1387 = vlaneseq
        %v1388 = vshrl.u32 %v1387, 7
        %v1389 = vadd.s32 %v1388, 40
        %1390 = vset.pattern.permute.xlu0 %v1389
        %1391 = vperm.xlu0 %1390, %v1356
        %v1392 = vpop.permute.xlu0 %1391
        %v1393 = vlaneseq
        %v1394 = vshrl.u32 %v1393, 7
        %v1395 = vadd.s32 %v1394, 48
        %1396 = vset.pattern.permute.xlu0 %v1395
        %1397 = vperm.xlu0 %1396, %v1356
        %v1398 = vpop.permute.xlu0 %1397
        %v1399 = vlaneseq
        %v1400 = vshrl.u32 %v1399, 7
        %v1401 = vadd.s32 %v1400, 56
        %1402 = vset.pattern.permute.xlu0 %v1401
        %1403 = vperm.xlu0 %1402, %v1356
        %v1404 = vpop.permute.xlu0 %1403
        %v1405 = vlaneseq
        %v1406 = vshrl.u32 %v1405, 7
        %v1407 = vadd.s32 %v1406, 64
        %1408 = vset.pattern.permute.xlu0 %v1407
        %1409 = vperm.xlu0 %1408, %v1356
        %v1410 = vpop.permute.xlu0 %1409
        %v1411 = vlaneseq
        %v1412 = vshrl.u32 %v1411, 7
        %v1413 = vadd.s32 %v1412, 72
        %1414 = vset.pattern.permute.xlu0 %v1413
        %1415 = vperm.xlu0 %1414, %v1356
        %v1416 = vpop.permute.xlu0 %1415
        %v1417 = vlaneseq
        %v1418 = vshrl.u32 %v1417, 7
        %v1419 = vadd.s32 %v1418, 80
        %1420 = vset.pattern.permute.xlu0 %v1419
        %1421 = vperm.xlu0 %1420, %v1356
        %v1422 = vpop.permute.xlu0 %1421
        %v1423 = vlaneseq
        %v1424 = vshrl.u32 %v1423, 7
        %v1425 = vadd.s32 %v1424, 88
        %1426 = vset.pattern.permute.xlu0 %v1425
        %1427 = vperm.xlu0 %1426, %v1356
        %v1428 = vpop.permute.xlu0 %1427
        %v1429 = vlaneseq
        %v1430 = vshrl.u32 %v1429, 7
        %v1431 = vadd.s32 %v1430, 96
        %1432 = vset.pattern.permute.xlu0 %v1431
        %1433 = vperm.xlu0 %1432, %v1356
        %v1434 = vpop.permute.xlu0 %1433
        %v1435 = vlaneseq
        %v1436 = vshrl.u32 %v1435, 7
        %v1437 = vadd.s32 %v1436, 104
        %1438 = vset.pattern.permute.xlu0 %v1437
        %1439 = vperm.xlu0 %1438, %v1356
        %v1440 = vpop.permute.xlu0 %1439
        %v1441 = vlaneseq
        %v1442 = vshrl.u32 %v1441, 7
        %v1443 = vadd.s32 %v1442, 112
        %1444 = vset.pattern.permute.xlu0 %v1443
        %1445 = vperm.xlu0 %1444, %v1356
        %v1446 = vpop.permute.xlu0 %1445
        %v1447 = vlaneseq
        %v1448 = vshrl.u32 %v1447, 7
        %v1449 = vadd.s32 %v1448, 120
        %1450 = vset.pattern.permute.xlu0 %v1449
        %1451 = vperm.xlu0 %1450, %v1356
        %v1452 = vpop.permute.xlu0 %1451
        %v1453 = vld [vmem:[%s6] sm:$0xff]
        %v1454 = vld [vmem:[%s6 + $0x8] sm:$0xff]
        %v1455 = vld [vmem:[%s6 + $0x10] sm:$0xff]
        %v1456 = vld [vmem:[%s6 + $0x18] sm:$0xff]
        %v1457 = vld [vmem:[%s6 + $0x20] sm:$0xff]
        %v1458 = vld [vmem:[%s6 + $0x28] sm:$0xff]
        %v1459 = vld [vmem:[%s6 + $0x30] sm:$0xff]
        %v1460 = vld [vmem:[%s6 + $0x38] sm:$0xff]
        %v1461 = vld [vmem:[%s6 + $0x40] sm:$0xff]
        %v1462 = vld [vmem:[%s6 + $0x48] sm:$0xff]
        %v1463 = vld [vmem:[%s6 + $0x50] sm:$0xff]
        %v1464 = vld [vmem:[%s6 + $0x58] sm:$0xff]
        %v1465 = vld [vmem:[%s6 + $0x60] sm:$0xff]
        %v1466 = vld [vmem:[%s6 + $0x68] sm:$0xff]
        %v1467 = vld [vmem:[%s6 + $0x70] sm:$0xff]
        %v1468 = vld [vmem:[%s6 + $0x78] sm:$0xff]
        %v1469 = vld [vmem:[#allocation4] sm:$0x1]
        %v1471 = vperm.slane %v1469, 0
        %1472 = vset.pattern.permute.xlu0 0
        %1473 = vperm.xlu0 %1472, %v1471
        %v1474 = vpop.permute.xlu0 %1473
        %v1476 = vlaneseq
        %v1477 = vand.u32 %v1476, 127
        %1478 = vst [vmem:[#allocation3] sm:$0xff] -inf
        %v1479 = vld [vmem:[#allocation2] sm:$0xff]
        %v1480 = vld [vmem:[#allocation2 + $0x8] sm:$0xff]
        %v1481 = vld [vmem:[#allocation2 + $0x10] sm:$0xff]
        %v1482 = vld [vmem:[#allocation2 + $0x18] sm:$0xff]
        %v1483 = vld [vmem:[#allocation2 + $0x20] sm:$0xff]
        %v1484 = vld [vmem:[#allocation2 + $0x28] sm:$0xff]
        %v1485 = vld [vmem:[#allocation2 + $0x30] sm:$0xff]
        %v1486 = vld [vmem:[#allocation2 + $0x38] sm:$0xff]
        %v1487 = vld [vmem:[#allocation2 + $0x40] sm:$0xff]
        %v1488 = vld [vmem:[#allocation2 + $0x48] sm:$0xff]
        %v1489 = vld [vmem:[#allocation2 + $0x50] sm:$0xff]
        %v1490 = vld [vmem:[#allocation2 + $0x58] sm:$0xff]
        %v1491 = vld [vmem:[#allocation2 + $0x60] sm:$0xff]
        %v1492 = vld [vmem:[#allocation2 + $0x68] sm:$0xff]
        %v1493 = vld [vmem:[#allocation2 + $0x70] sm:$0xff]
        %v1494 = vld [vmem:[#allocation2 + $0x78] sm:$0xff]
        %v1495 = vadd.f32 %v683, %v1479
        %v1496 = vadd.f32 %v689, %v1480
        %v1497 = vadd.f32 %v695, %v1481
        %v1498 = vadd.f32 %v701, %v1482
        %v1499 = vadd.f32 %v707, %v1483
        %v1500 = vadd.f32 %v713, %v1484
        %v1501 = vadd.f32 %v719, %v1485
        %v1502 = vadd.f32 %v725, %v1486
        %v1503 = vadd.f32 %v731, %v1487
        %v1504 = vadd.f32 %v737, %v1488
        %v1505 = vadd.f32 %v743, %v1489
        %v1506 = vadd.f32 %v749, %v1490
        %v1507 = vadd.f32 %v755, %v1491
        %v1508 = vadd.f32 %v761, %v1492
        %v1509 = vadd.f32 %v767, %v1493
        %v1510 = vadd.f32 %v773, %v1494
        %v1511 = vadd.f32 %v780, %v1479
        %v1512 = vadd.f32 %v786, %v1480
        %v1513 = vadd.f32 %v792, %v1481
        %v1514 = vadd.f32 %v798, %v1482
        %v1515 = vadd.f32 %v804, %v1483
        %v1516 = vadd.f32 %v810, %v1484
        %v1517 = vadd.f32 %v816, %v1485
        %v1518 = vadd.f32 %v822, %v1486
        %v1519 = vadd.f32 %v828, %v1487
        %v1520 = vadd.f32 %v834, %v1488
        %v1521 = vadd.f32 %v840, %v1489
        %v1522 = vadd.f32 %v846, %v1490
        %v1523 = vadd.f32 %v852, %v1491
        %v1524 = vadd.f32 %v858, %v1492
        %v1525 = vadd.f32 %v864, %v1493
        %v1526 = vadd.f32 %v870, %v1494
        %v1527 = vadd.f32 %v877, %v1479
        %v1528 = vadd.f32 %v883, %v1480
        %v1529 = vadd.f32 %v889, %v1481
        %v1530 = vadd.f32 %v895, %v1482
        %v1531 = vadd.f32 %v901, %v1483
        %v1532 = vadd.f32 %v907, %v1484
        %v1533 = vadd.f32 %v913, %v1485
        %v1534 = vadd.f32 %v919, %v1486
        %v1535 = vadd.f32 %v925, %v1487
        %v1536 = vadd.f32 %v931, %v1488
        %v1537 = vadd.f32 %v937, %v1489
        %v1538 = vadd.f32 %v943, %v1490
        %v1539 = vadd.f32 %v949, %v1491
        %v1540 = vadd.f32 %v955, %v1492
        %v1541 = vadd.f32 %v961, %v1493
        %v1542 = vadd.f32 %v967, %v1494
        %v1543 = vadd.f32 %v974, %v1479
        %v1544 = vadd.f32 %v980, %v1480
        %v1545 = vadd.f32 %v986, %v1481
        %v1546 = vadd.f32 %v992, %v1482
        %v1547 = vadd.f32 %v998, %v1483
        %v1548 = vadd.f32 %v1004, %v1484
        %v1549 = vadd.f32 %v1010, %v1485
        %v1550 = vadd.f32 %v1016, %v1486
        %v1551 = vadd.f32 %v1022, %v1487
        %v1552 = vadd.f32 %v1028, %v1488
        %v1553 = vadd.f32 %v1034, %v1489
        %v1554 = vadd.f32 %v1040, %v1490
        %v1555 = vadd.f32 %v1046, %v1491
        %v1556 = vadd.f32 %v1052, %v1492
        %v1557 = vadd.f32 %v1058, %v1493
        %v1558 = vadd.f32 %v1064, %v1494
        %v1559 = vadd.f32 %v1071, %v1479
        %v1560 = vadd.f32 %v1077, %v1480
        %v1561 = vadd.f32 %v1083, %v1481
        %v1562 = vadd.f32 %v1089, %v1482
        %v1563 = vadd.f32 %v1095, %v1483
        %v1564 = vadd.f32 %v1101, %v1484
        %v1565 = vadd.f32 %v1107, %v1485
        %v1566 = vadd.f32 %v1113, %v1486
        %v1567 = vadd.f32 %v1119, %v1487
        %v1568 = vadd.f32 %v1125, %v1488
        %v1569 = vadd.f32 %v1131, %v1489
        %v1570 = vadd.f32 %v1137, %v1490
        %v1571 = vadd.f32 %v1143, %v1491
        %v1572 = vadd.f32 %v1149, %v1492
        %v1573 = vadd.f32 %v1155, %v1493
        %v1574 = vadd.f32 %v1161, %v1494
        %v1575 = vadd.f32 %v1168, %v1479
        %v1576 = vadd.f32 %v1174, %v1480
        %v1577 = vadd.f32 %v1180, %v1481
        %v1578 = vadd.f32 %v1186, %v1482
        %v1579 = vadd.f32 %v1192, %v1483
        %v1580 = vadd.f32 %v1198, %v1484
        %v1581 = vadd.f32 %v1204, %v1485
        %v1582 = vadd.f32 %v1210, %v1486
        %v1583 = vadd.f32 %v1216, %v1487
        %v1584 = vadd.f32 %v1222, %v1488
        %v1585 = vadd.f32 %v1228, %v1489
        %v1586 = vadd.f32 %v1234, %v1490
        %v1587 = vadd.f32 %v1240, %v1491
        %v1588 = vadd.f32 %v1246, %v1492
        %v1589 = vadd.f32 %v1252, %v1493
        %v1590 = vadd.f32 %v1258, %v1494
        %v1591 = vadd.f32 %v1265, %v1479
        %v1592 = vadd.f32 %v1271, %v1480
        %v1593 = vadd.f32 %v1277, %v1481
        %v1594 = vadd.f32 %v1283, %v1482
        %v1595 = vadd.f32 %v1289, %v1483
        %v1596 = vadd.f32 %v1295, %v1484
        %v1597 = vadd.f32 %v1301, %v1485
        %v1598 = vadd.f32 %v1307, %v1486
        %v1599 = vadd.f32 %v1313, %v1487
        %v1600 = vadd.f32 %v1319, %v1488
        %v1601 = vadd.f32 %v1325, %v1489
        %v1602 = vadd.f32 %v1331, %v1490
        %v1603 = vadd.f32 %v1337, %v1491
        %v1604 = vadd.f32 %v1343, %v1492
        %v1605 = vadd.f32 %v1349, %v1493
        %v1606 = vadd.f32 %v1355, %v1494
        %v1607 = vadd.f32 %v1362, %v1479
        %v1608 = vadd.f32 %v1368, %v1480
        %v1609 = vadd.f32 %v1374, %v1481
        %v1610 = vadd.f32 %v1380, %v1482
        %v1611 = vadd.f32 %v1386, %v1483
        %v1612 = vadd.f32 %v1392, %v1484
        %v1613 = vadd.f32 %v1398, %v1485
        %v1614 = vadd.f32 %v1404, %v1486
        %v1615 = vadd.f32 %v1410, %v1487
        %v1616 = vadd.f32 %v1416, %v1488
        %v1617 = vadd.f32 %v1422, %v1489
        %v1618 = vadd.f32 %v1428, %v1490
        %v1619 = vadd.f32 %v1434, %v1491
        %v1620 = vadd.f32 %v1440, %v1492
        %v1621 = vadd.f32 %v1446, %v1493
        %v1622 = vadd.f32 %v1452, %v1494
        %v1623 = vtanh.pop %v1495
        %v1624 = vtanh.pop %v1496
        %v1625 = vtanh.pop %v1497
        %v1626 = vtanh.pop %v1498
        %v1627 = vtanh.pop %v1499
        %v1628 = vtanh.pop %v1500
        %v1629 = vtanh.pop %v1501
        %v1630 = vtanh.pop %v1502
        %v1631 = vtanh.pop %v1503
        %v1632 = vtanh.pop %v1504
        %v1633 = vtanh.pop %v1505
        %v1634 = vtanh.pop %v1506
        %v1635 = vtanh.pop %v1507
        %v1636 = vtanh.pop %v1508
        %v1637 = vtanh.pop %v1509
        %v1638 = vtanh.pop %v1510
        %v1639 = vtanh.pop %v1511
        %v1640 = vtanh.pop %v1512
        %v1641 = vtanh.pop %v1513
        %v1642 = vtanh.pop %v1514
        %v1643 = vtanh.pop %v1515
        %v1644 = vtanh.pop %v1516
        %v1645 = vtanh.pop %v1517
        %v1646 = vtanh.pop %v1518
        %v1647 = vtanh.pop %v1519
        %v1648 = vtanh.pop %v1520
        %v1649 = vtanh.pop %v1521
        %v1650 = vtanh.pop %v1522
        %v1651 = vtanh.pop %v1523
        %v1652 = vtanh.pop %v1524
        %v1653 = vtanh.pop %v1525
        %v1654 = vtanh.pop %v1526
        %v1655 = vtanh.pop %v1527
        %v1656 = vtanh.pop %v1528
        %v1657 = vtanh.pop %v1529
        %v1658 = vtanh.pop %v1530
        %v1659 = vtanh.pop %v1531
        %v1660 = vtanh.pop %v1532
        %v1661 = vtanh.pop %v1533
        %v1662 = vtanh.pop %v1534
        %v1663 = vtanh.pop %v1535
        %v1664 = vtanh.pop %v1536
        %v1665 = vtanh.pop %v1537
        %v1666 = vtanh.pop %v1538
        %v1667 = vtanh.pop %v1539
        %v1668 = vtanh.pop %v1540
        %v1669 = vtanh.pop %v1541
        %v1670 = vtanh.pop %v1542
        %v1671 = vtanh.pop %v1543
        %v1672 = vtanh.pop %v1544
        %v1673 = vtanh.pop %v1545
        %v1674 = vtanh.pop %v1546
        %v1675 = vtanh.pop %v1547
        %v1676 = vtanh.pop %v1548
        %v1677 = vtanh.pop %v1549
        %v1678 = vtanh.pop %v1550
        %v1679 = vtanh.pop %v1551
        %v1680 = vtanh.pop %v1552
        %v1681 = vtanh.pop %v1553
        %v1682 = vtanh.pop %v1554
        %v1683 = vtanh.pop %v1555
        %v1684 = vtanh.pop %v1556
        %v1685 = vtanh.pop %v1557
        %v1686 = vtanh.pop %v1558
        %v1687 = vtanh.pop %v1559
        %v1688 = vtanh.pop %v1560
        %v1689 = vtanh.pop %v1561
        %v1690 = vtanh.pop %v1562
        %v1691 = vtanh.pop %v1563
        %v1692 = vtanh.pop %v1564
        %v1693 = vtanh.pop %v1565
        %v1694 = vtanh.pop %v1566
        %v1695 = vtanh.pop %v1567
        %v1696 = vtanh.pop %v1568
        %v1697 = vtanh.pop %v1569
        %v1698 = vtanh.pop %v1570
        %v1699 = vtanh.pop %v1571
        %v1700 = vtanh.pop %v1572
        %v1701 = vtanh.pop %v1573
        %v1702 = vtanh.pop %v1574
        %v1703 = vtanh.pop %v1575
        %v1704 = vtanh.pop %v1576
        %v1705 = vtanh.pop %v1577
        %v1706 = vtanh.pop %v1578
        %v1707 = vtanh.pop %v1579
        %v1708 = vtanh.pop %v1580
        %v1709 = vtanh.pop %v1581
        %v1710 = vtanh.pop %v1582
        %v1711 = vtanh.pop %v1583
        %v1712 = vtanh.pop %v1584
        %v1713 = vtanh.pop %v1585
        %v1714 = vtanh.pop %v1586
        %v1715 = vtanh.pop %v1587
        %v1716 = vtanh.pop %v1588
        %v1717 = vtanh.pop %v1589
        %v1718 = vtanh.pop %v1590
        %v1719 = vtanh.pop %v1591
        %v1720 = vtanh.pop %v1592
        %v1721 = vtanh.pop %v1593
        %v1722 = vtanh.pop %v1594
        %v1723 = vtanh.pop %v1595
        %v1724 = vtanh.pop %v1596
        %v1725 = vtanh.pop %v1597
        %v1726 = vtanh.pop %v1598
        %v1727 = vtanh.pop %v1599
        %v1728 = vtanh.pop %v1600
        %v1729 = vtanh.pop %v1601
        %v1730 = vtanh.pop %v1602
        %v1731 = vtanh.pop %v1603
        %v1732 = vtanh.pop %v1604
        %v1733 = vtanh.pop %v1605
        %v1734 = vtanh.pop %v1606
        %v1735 = vtanh.pop %v1607
        %v1736 = vtanh.pop %v1608
        %v1737 = vtanh.pop %v1609
        %v1738 = vtanh.pop %v1610
        %v1739 = vtanh.pop %v1611
        %v1740 = vtanh.pop %v1612
        %v1741 = vtanh.pop %v1613
        %v1742 = vtanh.pop %v1614
        %v1743 = vtanh.pop %v1615
        %v1744 = vtanh.pop %v1616
        %v1745 = vtanh.pop %v1617
        %v1746 = vtanh.pop %v1618
        %v1747 = vtanh.pop %v1619
        %v1748 = vtanh.pop %v1620
        %v1749 = vtanh.pop %v1621
        %v1750 = vtanh.pop %v1622
        %1752 = vset.pattern.permute.xlu0 0
        %1753 = vperm.xlu0 %1752, %v1453
        %v1754 = vpop.permute.xlu0 %1753
        %1757 = vset.pattern.permute.xlu0 0
        %1758 = vperm.xlu0 %1757, %v1454
        %v1759 = vpop.permute.xlu0 %1758
        %1762 = vset.pattern.permute.xlu0 0
        %1763 = vperm.xlu0 %1762, %v1455
        %v1764 = vpop.permute.xlu0 %1763
        %1767 = vset.pattern.permute.xlu0 0
        %1768 = vperm.xlu0 %1767, %v1456
        %v1769 = vpop.permute.xlu0 %1768
        %1772 = vset.pattern.permute.xlu0 0
        %1773 = vperm.xlu0 %1772, %v1457
        %v1774 = vpop.permute.xlu0 %1773
        %1777 = vset.pattern.permute.xlu0 0
        %1778 = vperm.xlu0 %1777, %v1458
        %v1779 = vpop.permute.xlu0 %1778
        %1782 = vset.pattern.permute.xlu0 0
        %1783 = vperm.xlu0 %1782, %v1459
        %v1784 = vpop.permute.xlu0 %1783
        %1787 = vset.pattern.permute.xlu0 0
        %1788 = vperm.xlu0 %1787, %v1460
        %v1789 = vpop.permute.xlu0 %1788
        %1792 = vset.pattern.permute.xlu0 0
        %1793 = vperm.xlu0 %1792, %v1461
        %v1794 = vpop.permute.xlu0 %1793
        %1797 = vset.pattern.permute.xlu0 0
        %1798 = vperm.xlu0 %1797, %v1462
        %v1799 = vpop.permute.xlu0 %1798
        %1802 = vset.pattern.permute.xlu0 0
        %1803 = vperm.xlu0 %1802, %v1463
        %v1804 = vpop.permute.xlu0 %1803
        %1807 = vset.pattern.permute.xlu0 0
        %1808 = vperm.xlu0 %1807, %v1464
        %v1809 = vpop.permute.xlu0 %1808
        %1812 = vset.pattern.permute.xlu0 0
        %1813 = vperm.xlu0 %1812, %v1465
        %v1814 = vpop.permute.xlu0 %1813
        %1817 = vset.pattern.permute.xlu0 0
        %1818 = vperm.xlu0 %1817, %v1466
        %v1819 = vpop.permute.xlu0 %1818
        %1822 = vset.pattern.permute.xlu0 0
        %1823 = vperm.xlu0 %1822, %v1467
        %v1824 = vpop.permute.xlu0 %1823
        %1827 = vset.pattern.permute.xlu0 0
        %1828 = vperm.xlu0 %1827, %v1468
        %v1829 = vpop.permute.xlu0 %1828
        %v1831 = vmul.f32 %v1623, %v1754
        %v1832 = vmul.f32 %v1624, %v1759
        %v1833 = vmul.f32 %v1625, %v1764
        %v1834 = vmul.f32 %v1626, %v1769
        %v1835 = vmul.f32 %v1627, %v1774
        %v1836 = vmul.f32 %v1628, %v1779
        %v1837 = vmul.f32 %v1629, %v1784
        %v1838 = vmul.f32 %v1630, %v1789
        %v1839 = vmul.f32 %v1631, %v1794
        %v1840 = vmul.f32 %v1632, %v1799
        %v1841 = vmul.f32 %v1633, %v1804
        %v1842 = vmul.f32 %v1634, %v1809
        %v1843 = vmul.f32 %v1635, %v1814
        %v1844 = vmul.f32 %v1636, %v1819
        %v1845 = vmul.f32 %v1637, %v1824
        %v1846 = vmul.f32 %v1638, %v1829
        %v1847 = vmul.f32 %v1639, %v1754
        %v1848 = vmul.f32 %v1640, %v1759
        %v1849 = vmul.f32 %v1641, %v1764
        %v1850 = vmul.f32 %v1642, %v1769
        %v1851 = vmul.f32 %v1643, %v1774
        %v1852 = vmul.f32 %v1644, %v1779
        %v1853 = vmul.f32 %v1645, %v1784
        %v1854 = vmul.f32 %v1646, %v1789
        %v1855 = vmul.f32 %v1647, %v1794
        %v1856 = vmul.f32 %v1648, %v1799
        %v1857 = vmul.f32 %v1649, %v1804
        %v1858 = vmul.f32 %v1650, %v1809
        %v1859 = vmul.f32 %v1651, %v1814
        %v1860 = vmul.f32 %v1652, %v1819
        %v1861 = vmul.f32 %v1653, %v1824
        %v1862 = vmul.f32 %v1654, %v1829
        %v1863 = vmul.f32 %v1655, %v1754
        %v1864 = vmul.f32 %v1656, %v1759
        %v1865 = vmul.f32 %v1657, %v1764
        %v1866 = vmul.f32 %v1658, %v1769
        %v1867 = vmul.f32 %v1659, %v1774
        %v1868 = vmul.f32 %v1660, %v1779
        %v1869 = vmul.f32 %v1661, %v1784
        %v1870 = vmul.f32 %v1662, %v1789
        %v1871 = vmul.f32 %v1663, %v1794
        %v1872 = vmul.f32 %v1664, %v1799
        %v1873 = vmul.f32 %v1665, %v1804
        %v1874 = vmul.f32 %v1666, %v1809
        %v1875 = vmul.f32 %v1667, %v1814
        %v1876 = vmul.f32 %v1668, %v1819
        %v1877 = vmul.f32 %v1669, %v1824
        %v1878 = vmul.f32 %v1670, %v1829
        %v1879 = vmul.f32 %v1671, %v1754
        %v1880 = vmul.f32 %v1672, %v1759
        %v1881 = vmul.f32 %v1673, %v1764
        %v1882 = vmul.f32 %v1674, %v1769
        %v1883 = vmul.f32 %v1675, %v1774
        %v1884 = vmul.f32 %v1676, %v1779
        %v1885 = vmul.f32 %v1677, %v1784
        %v1886 = vmul.f32 %v1678, %v1789
        %v1887 = vmul.f32 %v1679, %v1794
        %v1888 = vmul.f32 %v1680, %v1799
        %v1889 = vmul.f32 %v1681, %v1804
        %v1890 = vmul.f32 %v1682, %v1809
        %v1891 = vmul.f32 %v1683, %v1814
        %v1892 = vmul.f32 %v1684, %v1819
        %v1893 = vmul.f32 %v1685, %v1824
        %v1894 = vmul.f32 %v1686, %v1829
        %v1895 = vmul.f32 %v1687, %v1754
        %v1896 = vmul.f32 %v1688, %v1759
        %v1897 = vmul.f32 %v1689, %v1764
        %v1898 = vmul.f32 %v1690, %v1769
        %v1899 = vmul.f32 %v1691, %v1774
        %v1900 = vmul.f32 %v1692, %v1779
        %v1901 = vmul.f32 %v1693, %v1784
        %v1902 = vmul.f32 %v1694, %v1789
        %v1903 = vmul.f32 %v1695, %v1794
        %v1904 = vmul.f32 %v1696, %v1799
        %v1905 = vmul.f32 %v1697, %v1804
        %v1906 = vmul.f32 %v1698, %v1809
        %v1907 = vmul.f32 %v1699, %v1814
        %v1908 = vmul.f32 %v1700, %v1819
        %v1909 = vmul.f32 %v1701, %v1824
        %v1910 = vmul.f32 %v1702, %v1829
        %v1911 = vmul.f32 %v1703, %v1754
        %v1912 = vmul.f32 %v1704, %v1759
        %v1913 = vmul.f32 %v1705, %v1764
        %v1914 = vmul.f32 %v1706, %v1769
        %v1915 = vmul.f32 %v1707, %v1774
        %v1916 = vmul.f32 %v1708, %v1779
        %v1917 = vmul.f32 %v1709, %v1784
        %v1918 = vmul.f32 %v1710, %v1789
        %v1919 = vmul.f32 %v1711, %v1794
        %v1920 = vmul.f32 %v1712, %v1799
        %v1921 = vmul.f32 %v1713, %v1804
        %v1922 = vmul.f32 %v1714, %v1809
        %v1923 = vmul.f32 %v1715, %v1814
        %v1924 = vmul.f32 %v1716, %v1819
        %v1925 = vmul.f32 %v1717, %v1824
        %v1926 = vmul.f32 %v1718, %v1829
        %v1927 = vmul.f32 %v1719, %v1754
        %v1928 = vmul.f32 %v1720, %v1759
        %v1929 = vmul.f32 %v1721, %v1764
        %v1930 = vmul.f32 %v1722, %v1769
        %v1931 = vmul.f32 %v1723, %v1774
        %v1932 = vmul.f32 %v1724, %v1779
        %v1933 = vmul.f32 %v1725, %v1784
        %v1934 = vmul.f32 %v1726, %v1789
        %v1935 = vmul.f32 %v1727, %v1794
        %v1936 = vmul.f32 %v1728, %v1799
        %v1937 = vmul.f32 %v1729, %v1804
        %v1938 = vmul.f32 %v1730, %v1809
        %v1939 = vmul.f32 %v1731, %v1814
        %v1940 = vmul.f32 %v1732, %v1819
        %v1941 = vmul.f32 %v1733, %v1824
        %v1942 = vmul.f32 %v1734, %v1829
        %v1943 = vmul.f32 %v1735, %v1754
        %v1944 = vmul.f32 %v1736, %v1759
        %v1945 = vmul.f32 %v1737, %v1764
        %v1946 = vmul.f32 %v1738, %v1769
        %v1947 = vmul.f32 %v1739, %v1774
        %v1948 = vmul.f32 %v1740, %v1779
        %v1949 = vmul.f32 %v1741, %v1784
        %v1950 = vmul.f32 %v1742, %v1789
        %v1951 = vmul.f32 %v1743, %v1794
        %v1952 = vmul.f32 %v1744, %v1799
        %v1953 = vmul.f32 %v1745, %v1804
        %v1954 = vmul.f32 %v1746, %v1809
        %v1955 = vmul.f32 %v1747, %v1814
        %v1956 = vmul.f32 %v1748, %v1819
        %v1957 = vmul.f32 %v1749, %v1824
        %v1958 = vmul.f32 %v1750, %v1829
        %v1959 = vadd.f32 %v1831, %v1832
        %v1960 = vadd.f32 %v1959, %v1833
        %v1961 = vadd.f32 %v1960, %v1834
        %v1962 = vadd.f32 %v1961, %v1835
        %v1963 = vadd.f32 %v1962, %v1836
        %v1964 = vadd.f32 %v1963, %v1837
        %v1965 = vadd.f32 %v1964, %v1838
        %v1966 = vadd.f32 %v1965, %v1839
        %v1967 = vadd.f32 %v1966, %v1840
        %v1968 = vadd.f32 %v1967, %v1841
        %v1969 = vadd.f32 %v1968, %v1842
        %v1970 = vadd.f32 %v1969, %v1843
        %v1971 = vadd.f32 %v1970, %v1844
        %v1972 = vadd.f32 %v1971, %v1845
        %v1973 = vadd.f32 %v1972, %v1846
        %v1974 = vrot.slane %v1973, 4
        %v1975 = vadd.f32 %v1973, %v1974
        %v1976 = vrot.slane %v1975, 2
        %v1977 = vadd.f32 %v1975, %v1976
        %v1978 = vrot.slane %v1977, 1
        %v1979 = vadd.f32 %v1977, %v1978
        %v1980 = vadd.f32 %v1847, %v1848
        %v1981 = vadd.f32 %v1980, %v1849
        %v1982 = vadd.f32 %v1981, %v1850
        %v1983 = vadd.f32 %v1982, %v1851
        %v1984 = vadd.f32 %v1983, %v1852
        %v1985 = vadd.f32 %v1984, %v1853
        %v1986 = vadd.f32 %v1985, %v1854
        %v1987 = vadd.f32 %v1986, %v1855
        %v1988 = vadd.f32 %v1987, %v1856
        %v1989 = vadd.f32 %v1988, %v1857
        %v1990 = vadd.f32 %v1989, %v1858
        %v1991 = vadd.f32 %v1990, %v1859
        %v1992 = vadd.f32 %v1991, %v1860
        %v1993 = vadd.f32 %v1992, %v1861
        %v1994 = vadd.f32 %v1993, %v1862
        %v1995 = vrot.slane %v1994, 4
        %v1996 = vadd.f32 %v1994, %v1995
        %v1997 = vrot.slane %v1996, 2
        %v1998 = vadd.f32 %v1996, %v1997
        %v1999 = vrot.slane %v1998, 1
        %v2000 = vadd.f32 %v1998, %v1999
        %v2001 = vadd.f32 %v1863, %v1864
        %v2002 = vadd.f32 %v2001, %v1865
        %v2003 = vadd.f32 %v2002, %v1866
        %v2004 = vadd.f32 %v2003, %v1867
        %v2005 = vadd.f32 %v2004, %v1868
        %v2006 = vadd.f32 %v2005, %v1869
        %v2007 = vadd.f32 %v2006, %v1870
        %v2008 = vadd.f32 %v2007, %v1871
        %v2009 = vadd.f32 %v2008, %v1872
        %v2010 = vadd.f32 %v2009, %v1873
        %v2011 = vadd.f32 %v2010, %v1874
        %v2012 = vadd.f32 %v2011, %v1875
        %v2013 = vadd.f32 %v2012, %v1876
        %v2014 = vadd.f32 %v2013, %v1877
        %v2015 = vadd.f32 %v2014, %v1878
        %v2016 = vrot.slane %v2015, 4
        %v2017 = vadd.f32 %v2015, %v2016
        %v2018 = vrot.slane %v2017, 2
        %v2019 = vadd.f32 %v2017, %v2018
        %v2020 = vrot.slane %v2019, 1
        %v2021 = vadd.f32 %v2019, %v2020
        %v2022 = vadd.f32 %v1879, %v1880
        %v2023 = vadd.f32 %v2022, %v1881
        %v2024 = vadd.f32 %v2023, %v1882
        %v2025 = vadd.f32 %v2024, %v1883
        %v2026 = vadd.f32 %v2025, %v1884
        %v2027 = vadd.f32 %v2026, %v1885
        %v2028 = vadd.f32 %v2027, %v1886
        %v2029 = vadd.f32 %v2028, %v1887
        %v2030 = vadd.f32 %v2029, %v1888
        %v2031 = vadd.f32 %v2030, %v1889
        %v2032 = vadd.f32 %v2031, %v1890
        %v2033 = vadd.f32 %v2032, %v1891
        %v2034 = vadd.f32 %v2033, %v1892
        %v2035 = vadd.f32 %v2034, %v1893
        %v2036 = vadd.f32 %v2035, %v1894
        %v2037 = vrot.slane %v2036, 4
        %v2038 = vadd.f32 %v2036, %v2037
        %v2039 = vrot.slane %v2038, 2
        %v2040 = vadd.f32 %v2038, %v2039
        %v2041 = vrot.slane %v2040, 1
        %v2042 = vadd.f32 %v2040, %v2041
        %v2043 = vadd.f32 %v1895, %v1896
        %v2044 = vadd.f32 %v2043, %v1897
        %v2045 = vadd.f32 %v2044, %v1898
        %v2046 = vadd.f32 %v2045, %v1899
        %v2047 = vadd.f32 %v2046, %v1900
        %v2048 = vadd.f32 %v2047, %v1901
        %v2049 = vadd.f32 %v2048, %v1902
        %v2050 = vadd.f32 %v2049, %v1903
        %v2051 = vadd.f32 %v2050, %v1904
        %v2052 = vadd.f32 %v2051, %v1905
        %v2053 = vadd.f32 %v2052, %v1906
        %v2054 = vadd.f32 %v2053, %v1907
        %v2055 = vadd.f32 %v2054, %v1908
        %v2056 = vadd.f32 %v2055, %v1909
        %v2057 = vadd.f32 %v2056, %v1910
        %v2058 = vrot.slane %v2057, 4
        %v2059 = vadd.f32 %v2057, %v2058
        %v2060 = vrot.slane %v2059, 2
        %v2061 = vadd.f32 %v2059, %v2060
        %v2062 = vrot.slane %v2061, 1
        %v2063 = vadd.f32 %v2061, %v2062
        %v2064 = vadd.f32 %v1911, %v1912
        %v2065 = vadd.f32 %v2064, %v1913
        %v2066 = vadd.f32 %v2065, %v1914
        %v2067 = vadd.f32 %v2066, %v1915
        %v2068 = vadd.f32 %v2067, %v1916
        %v2069 = vadd.f32 %v2068, %v1917
        %v2070 = vadd.f32 %v2069, %v1918
        %v2071 = vadd.f32 %v2070, %v1919
        %v2072 = vadd.f32 %v2071, %v1920
        %v2073 = vadd.f32 %v2072, %v1921
        %v2074 = vadd.f32 %v2073, %v1922
        %v2075 = vadd.f32 %v2074, %v1923
        %v2076 = vadd.f32 %v2075, %v1924
        %v2077 = vadd.f32 %v2076, %v1925
        %v2078 = vadd.f32 %v2077, %v1926
        %v2079 = vrot.slane %v2078, 4
        %v2080 = vadd.f32 %v2078, %v2079
        %v2081 = vrot.slane %v2080, 2
        %v2082 = vadd.f32 %v2080, %v2081
        %v2083 = vrot.slane %v2082, 1
        %v2084 = vadd.f32 %v2082, %v2083
        %v2085 = vadd.f32 %v1927, %v1928
        %v2086 = vadd.f32 %v2085, %v1929
        %v2087 = vadd.f32 %v2086, %v1930
        %v2088 = vadd.f32 %v2087, %v1931
        %v2089 = vadd.f32 %v2088, %v1932
        %v2090 = vadd.f32 %v2089, %v1933
        %v2091 = vadd.f32 %v2090, %v1934
        %v2092 = vadd.f32 %v2091, %v1935
        %v2093 = vadd.f32 %v2092, %v1936
        %v2094 = vadd.f32 %v2093, %v1937
        %v2095 = vadd.f32 %v2094, %v1938
        %v2096 = vadd.f32 %v2095, %v1939
        %v2097 = vadd.f32 %v2096, %v1940
        %v2098 = vadd.f32 %v2097, %v1941
        %v2099 = vadd.f32 %v2098, %v1942
        %v2100 = vrot.slane %v2099, 4
        %v2101 = vadd.f32 %v2099, %v2100
        %v2102 = vrot.slane %v2101, 2
        %v2103 = vadd.f32 %v2101, %v2102
        %v2104 = vrot.slane %v2103, 1
        %v2105 = vadd.f32 %v2103, %v2104
        %v2106 = vadd.f32 %v1943, %v1944
        %v2107 = vadd.f32 %v2106, %v1945
        %v2108 = vadd.f32 %v2107, %v1946
        %v2109 = vadd.f32 %v2108, %v1947
        %v2110 = vadd.f32 %v2109, %v1948
        %v2111 = vadd.f32 %v2110, %v1949
        %v2112 = vadd.f32 %v2111, %v1950
        %v2113 = vadd.f32 %v2112, %v1951
        %v2114 = vadd.f32 %v2113, %v1952
        %v2115 = vadd.f32 %v2114, %v1953
        %v2116 = vadd.f32 %v2115, %v1954
        %v2117 = vadd.f32 %v2116, %v1955
        %v2118 = vadd.f32 %v2117, %v1956
        %v2119 = vadd.f32 %v2118, %v1957
        %v2120 = vadd.f32 %v2119, %v1958
        %v2121 = vrot.slane %v2120, 4
        %v2122 = vadd.f32 %v2120, %v2121
        %v2123 = vrot.slane %v2122, 2
        %v2124 = vadd.f32 %v2122, %v2123
        %v2125 = vrot.slane %v2124, 1
        %v2126 = vadd.f32 %v2124, %v2125
        %v2127 = vadd.f32 %v1979, %v1474
        %v2128 = vadd.f32 %v2000, %v1474
        %v2129 = vadd.f32 %v2021, %v1474
        %v2130 = vadd.f32 %v2042, %v1474
        %v2131 = vadd.f32 %v2063, %v1474
        %v2132 = vadd.f32 %v2084, %v1474
        %v2133 = vadd.f32 %v2105, %v1474
        %v2134 = vadd.f32 %v2126, %v1474
        %vm2143 = vcmask 1041409
        %v2144 = vsel %vm2143, %v2128, %v2127
        %vm2145 = vcmask 1042434
        %v2146 = vsel %vm2145, %v2129, %v2144
        %vm2147 = vcmask 1043459
        %v2148 = vsel %vm2147, %v2130, %v2146
        %vm2149 = vcmask 1044484
        %v2150 = vsel %vm2149, %v2131, %v2148
        %vm2151 = vcmask 1045509
        %v2152 = vsel %vm2151, %v2132, %v2150
        %vm2153 = vcmask 1046534
        %v2154 = vsel %vm2153, %v2133, %v2152
        %vm2155 = vcmask 1047559
        %v2156 = vsel %vm2155, %v2134, %v2154
        %2158 = vst [vmem:[%s365] sm:$0xff] %v2156
        %vm2159 = vcmp.lt.s32.totalorder %v1477, 16
        %v2160 = vsel %vm2159, 1, 0
        %vm2161 = vcmp.eq.s32.totalorder %v2160, 1
        %v2162 = vsel %vm2161, %v2156, -inf
        %v2163 = vld [vmem:[#allocation3] sm:$0xff]
        %v2164 = vmax.f32 %v2163, %v2162
        %2165 = vst [vmem:[#allocation3] sm:$0xff] %v2164
        %v2166 = vld [vmem:[#allocation3] sm:$0xff]
        %2167 = vmax.xlane.f32.xlu0 %v2166
        %v2168 = vpop.xlane.xlu0 %2167
        %vm2169 = vcmask 7168
        %2170 = vst.msk [vmem:[%s393] sm:$0xff] %vm2169, %v2168
        %s2171 = sand.u32 %s228, 1
        %s2172 = scalar_lea.sflag [#allocation6], %s2171
        %s2173 = sand.u32 %s228, 1
        %s2174 = smul.addr %s2173, 8
        %s2175 = scalar_lea.vmem [#allocation5], %s2174
        %p2176 = scmp.lt.s32.totalorder %s30, 1
        %s2177 = scalar_select %p2176, %s30, 1
        %p2178 = scmp.lt.s32.totalorder %s31, 0
        %s2179 = scalar_select %p2178, %s31, 0
        %s2180 = sadd.s32 %s2179, %s2177
        %s2181 = smul.addr %s2180, 8
        %s2182 = scalar_lea.vmem %s9, %s2181
        // Predicated region
        $region57: #{tpu_custom_call.1} parent=51 // pred_check
          %p2183 = pneg %p238
        $region58: #{tpu_custom_call.1} parent=51 // pred_check_branch
          %2185 = sbr.rel (%p2183) target = $region60
        $region59: #{tpu_custom_call.1} parent=51 // pred_region
          %2187 = vsyncadd %s2172, 0
          %s2188 = sadd.s32 %s31, %s30
          %s2189 = smul.addr %s2188, 8
          %s2190 = scalar_lea.hbm %s8, %s2189
          %s2192 = sshll.u32 %s2175, 4
          %s2193 = int_to_ptr.vmem [resolvable:$true] %s2192
          %s2194 = sshll.u32 %s2190, 4
          %s2195 = int_to_ptr.hbm [resolvable:$true] %s2194
          %2197 = dma.vmem_to_hbm [thread:$0]  %s2193, 128, %s2195, %s2172
        $region60: #{tpu_custom_call.1} parent=51 // pred_fallthru
          _
        // Predicated region
        $region61: #{tpu_custom_call.1} parent=51 // pred_check
          %p2198 = pneg %p266
        $region62: #{tpu_custom_call.1} parent=51 // pred_check_branch
          %2200 = sbr.rel (%p2198) target = $region64
        $region63: #{tpu_custom_call.1} parent=51 // pred_region
          _
        $region64: #{tpu_custom_call.1} parent=51 // pred_fallthru
          _
      $region52: #{tpu_custom_call.1} parent=5 // pred_fallthru
        _
      %p2201 = scmp.le.s32.totalorder 2, %s21
      // Predicated region
      $region65: #{tpu_custom_call.1} parent=5 // pred_check
        %p2202 = pneg %p2201
      $region66: #{tpu_custom_call.1} parent=5 // pred_check_branch
        %2204 = sbr.rel (%p2202) target = $region68
      $region67: #{tpu_custom_call.1} parent=5 // pred_region
        %s2205 = ssub.s32 %s21, 2
        // Predicated region
        $region69: #{tpu_custom_call.1} parent=67 // pred_check
          %p2206 = pneg %p244
        $region70: #{tpu_custom_call.1} parent=67 // pred_check_branch
          %2208 = sbr.rel (%p2206) target = $region72
        $region71: #{tpu_custom_call.1} parent=67 // pred_region
          %s2209 = sand.u32 %s229, 1
          %s2210 = scalar_lea.sflag [#allocation6], %s2209
          %s2211 = sand.u32 %s229, 1
          %s2212 = smul.addr %s2211, 8
          %s2213 = scalar_lea.vmem [#allocation5], %s2212
          %2215 = dma.done %s2210, 128
        $region72: #{tpu_custom_call.1} parent=67 // pred_fallthru
          _
        // Predicated region
        $region73: #{tpu_custom_call.1} parent=67 // pred_check
          %p2216 = pneg %p272
        $region74: #{tpu_custom_call.1} parent=67 // pred_check_branch
          %2218 = sbr.rel (%p2216) target = $region76
        $region75: #{tpu_custom_call.1} parent=67 // pred_region
          %p2219 = scmp.lt.s32.totalorder %s32, 1
          %s2220 = scalar_select %p2219, %s32, 1
          %p2221 = scmp.lt.s32.totalorder %s33, 0
          %s2222 = scalar_select %p2221, %s33, 0
          %s2223 = sadd.s32 %s2222, %s2220
          %s2224 = smul.addr %s2223, 8
          %s2225 = scalar_lea.vmem %s9, %s2224
        $region76: #{tpu_custom_call.1} parent=67 // pred_fallthru
          _
      $region68: #{tpu_custom_call.1} parent=5 // pred_fallthru
        _
    $region6: #{tpu_custom_call.1} parent=1 // loop_footer
      %s25 = sadd.s32 1, %s21
    $region7: #{tpu_custom_call.1} parent=1 // loop_footer_branch
      %20 = sbr.rel target = $region3
    $region8: #{tpu_custom_call.1} parent=1 // loop_exit
      _
    %2226 = vsyncpa [#allocation6], 1
    %s2227 = scalar_lea.sflag [#allocation6], 1
    %2228 = vsyncpa %s2227, 1

</llo_original>
